<compile_context>
chip_gen: v7x
topology: tpu7x:2x2x1
jax: 0.10.0
libtpu: 0.0.40
codegen_flags: <defaults>
</compile_context>

<pallas_src>
import math
import functools

import jax
import jax.numpy as jnp
from jax.experimental import pallas as pl
from jax.experimental.pallas import tpu as pltpu

LANE = 128
TOK_TILE = 1024            # default token tile; sweep up to 2048 on v7x
VMEM_BUDGET = 32 << 20     # self-imposed estimate budget for tile selection
VMEM_LIMIT = 48 << 20      # scoped VMEM limit handed to Mosaic (<= v7x 64 MiB)


def _round_up(x, m):
    return (x + m - 1) // m * m


# ----------------------------- Pallas kernel --------------------------------
def temporal_emb_kernel(idx_ref, table_ref, out_ref):
    # idx_ref  : (F, TOK)        int32   fused-table row ids (offsets applied),
    #                                    tokens on lanes
    # table_ref: (C_pad, D)      float32 fused embedding table (C_pad == 128)
    # out_ref  : (TOK, D)        float32
    num_tables = idx_ref.shape[0]
    c_pad = table_ref.shape[0]
    tok = idx_ref.shape[1]

    # Multi-hot selection matrix, transposed: fused-table rows on sublanes,
    # tokens on lanes (same layout idx arrives in -> no relayout).  Segments
    # are disjoint, so boolean OR accumulation + one final cast suffices.
    row_id = jax.lax.broadcasted_iota(jnp.int32, (c_pad, tok), 0)
    hot = idx_ref[0, :][None, :] == row_id
    for t in range(1, num_tables):                # small static loop (4 or 5)
        hot = jnp.logical_or(hot, idx_ref[t, :][None, :] == row_id)
    hot_f = hot.astype(jnp.float32)               # single cast

    # (C_pad, TOK)^T @ (C_pad, D) -> (TOK, D): one K=128 MXU pass per tile;
    # the LHS transpose is absorbed by the MXU (contraction on dim 0), not
    # the XLU.  HIGHEST precision => generation-independent f32 accuracy.
    out_ref[...] = jax.lax.dot_general(
        hot_f, table_ref[...],
        dimension_numbers=(((0,), (0,)), ((), ())),
        preferred_element_type=jnp.float32,
        precision=jax.lax.Precision.HIGHEST)


# ----------------------------- parameter setup ------------------------------
def fixed_embedding_table(c_in, d_model):
    """Sinusoidal table identical to FixedEmbedding.__init__ (d_model even)."""
    pos = jnp.arange(c_in, dtype=jnp.float32)[:, None]
    div = jnp.exp(jnp.arange(0, d_model, 2, dtype=jnp.float32)
                  * (-(math.log(10000.0) / d_model)))
    w = jnp.zeros((c_in, d_model), jnp.float32)
    w = w.at[:, 0::2].set(jnp.sin(pos * div))
    w = w.at[:, 1::2].set(jnp.cos(pos * div))
    return w


def _table_sizes(freq):
    # Feature-column order in the PyTorch forward: month, day, weekday, hour, (minute)
    return (13, 32, 7, 24) + ((4,) if freq == "t" else ())


def build_temporal_tables(d_model, freq="h"):
    """Fused table: per-feature sinusoidal tables concatenated row-wise,
    zero-padded on rows only to (128, d_model).  The embedding dim is NOT
    padded -> no extra output HBM traffic and no epilogue d-slice."""
    sizes = _table_sizes(freq)
    tabs = [fixed_embedding_table(c, d_model) for c in sizes]
    fused = jnp.concatenate(tabs, axis=0)                    # (76 or 80, d_model)
    c_pad = _round_up(fused.shape[0], LANE)                  # -> 128 (MXU K / sublanes)
    fused = jnp.pad(fused, ((0, c_pad - fused.shape[0]), (0, 0)))
    return fused                                             # (128, d_model) float32


# ------------------------------ tile selection --------------------------------
def _vmem_estimate(tile, d_model, num_tables):
    out_b = 2 * tile * d_model * 4          # double-buffered output tile
    idx_b = 2 * num_tables * tile * 4       # double-buffered index tile
    tab_b = 2 * LANE * d_model * 4          # (double-buffered) resident table
    hot_b = 3 * LANE * tile * 4             # hot + iota / compare temporaries
    return out_b + idx_b + tab_b + hot_b


def _pick_tile(n_pad, d_model, num_tables, tok_tile):
    """Largest multiple-of-128 token tile that (a) divides n_pad, so the
    epilogue row-slice is a no-op whenever n_tok % 128 == 0, (b) is <= tok_tile,
    (c) leaves >=2 grid steps when possible (v7x megacore), and (d) fits the
    VMEM budget."""
    m = n_pad // LANE
    best = 1
    for d in range(1, m + 1):
        if d * LANE > tok_tile:
            break
        if m % d:
            continue
        if m >= 2 and m // d < 2:            # keep >= 2 grid steps for megacore
            continue
        if _vmem_estimate(d * LANE, d_model, num_tables) > VMEM_BUDGET:
            continue
        best = d
    return best * LANE


# ------------------------------- wrapper -------------------------------------
@functools.partial(jax.jit, static_argnames=("d_model", "freq", "tok_tile"))
def temporal_embedding(x, fused_table, *, d_model, freq="h", tok_tile=TOK_TILE):
    """x: (B, L, >=F) integer time marks [month, day, weekday, hour, (minute)].
    Returns (B, L, d_model) float32."""
    sizes = _table_sizes(freq)
    num_tables = len(sizes)
    offsets, acc = [], 0
    for s in sizes:
        offsets.append(acc)
        acc += s
    n_rows = acc                                              # 76 or 80 (< 128)

    B, L, _ = x.shape
    n_tok = B * L
    c_pad, _ = fused_table.shape

    n_pad = _round_up(n_tok, LANE)
    tile = _pick_tile(n_pad, d_model, num_tables, tok_tile)

    feat = x[..., :num_tables].astype(jnp.int32)              # (B, L, F)
    # nn.Embedding would raise on out-of-range marks; clamp so OOB values can
    # never bleed into a neighbouring fused-table segment.
    max_idx = jnp.array(sizes, jnp.int32) - 1
    feat = jnp.clip(feat, 0, max_idx[None, None, :])
    idx = feat.reshape(n_tok, num_tables) + jnp.array(offsets, jnp.int32)[None, :]
    # Pad tokens (if any) with a zero row of the fused table -> padded output
    # rows are exactly zero.
    idx = jnp.pad(idx.T, ((0, 0), (0, n_pad - n_tok)),
                  constant_values=n_rows)                     # (F, n_pad)

    cost = pl.CostEstimate(
        flops=2 * n_pad * c_pad * d_model,
        transcendentals=0,
        bytes_accessed=(num_tables * n_pad * 4
                        + c_pad * d_model * 4
                        + n_pad * d_model * 4))

    out = pl.pallas_call(
        temporal_emb_kernel,
        out_shape=jax.ShapeDtypeStruct((n_pad, d_model), jnp.float32),
        grid_spec=pltpu.PrefetchScalarGridSpec(
            num_scalar_prefetch=0,
            grid=(n_pad // tile,),
            in_specs=[
                pl.BlockSpec((num_tables, tile), lambda i: (0, i)),
                pl.BlockSpec((c_pad, d_model), lambda i: (0, 0)),  # resident table
            ],
            out_specs=pl.BlockSpec((tile, d_model), lambda i: (i, 0)),
        ),
        compiler_params=pltpu.CompilerParams(
            dimension_semantics=("parallel",),       # v7x megacore shards token tiles
            vmem_limit_bytes=VMEM_LIMIT),
        cost_estimate=cost,
    )(idx, fused_table)

    if n_pad != n_tok:                   # no-op whenever n_tok % 128 == 0
        out = out[:n_tok]
    return out.reshape(B, L, d_model)


# ------------------------------- reference -----------------------------------
def temporal_embedding_ref(x, d_model, freq="h"):
    sizes = _table_sizes(freq)
    out = 0.0
    for t, c in enumerate(sizes):
        tab = fixed_embedding_table(c, d_model)
        out = out + jnp.take(tab, x[..., t].astype(jnp.int32), axis=0)
    return out


# --------------------------------- main ---------------------------------------
if __name__ == "__main__":
    B, L, d_model = 2, 8, 32

    key = jax.random.PRNGKey(0)
    km, kd, kw, kh, kmin = jax.random.split(key, 5)
    month = jax.random.randint(km, (B, L, 1), 0, 13)
    day = jax.random.randint(kd, (B, L, 1), 0, 32)
    weekday = jax.random.randint(kw, (B, L, 1), 0, 7)
    hour = jax.random.randint(kh, (B, L, 1), 0, 24)
    minute = jax.random.randint(kmin, (B, L, 1), 0, 4)
    x = jnp.concatenate([month, day, weekday, hour, minute], axis=-1)  # (B, L, 5)

    for freq in ("h", "t"):
        fused = build_temporal_tables(d_model, freq=freq)
        out = temporal_embedding(x, fused, d_model=d_model, freq=freq)
        out = jax.block_until_ready(out)
        ref = temporal_embedding_ref(x, d_model, freq=freq)
        assert out.shape == (B, L, d_model)
        assert jnp.allclose(out, ref, atol=1e-5, rtol=1e-5), f"mismatch vs reference (freq={freq})"

    print("KERNEL_OK")
</pallas_src>

<mosaic_0001>
module attributes {stable_mosaic.version = 11 : i64} {
  func.func @temporal_emb_kernel(%arg0: i32, %arg1: memref<4x128xi32, #tpu.memory_space<vmem>>, %arg2: memref<128x32xf32, #tpu.memory_space<vmem>>, %arg3: memref<128x32xf32, #tpu.memory_space<vmem>>) attributes {dimension_semantics = [#tpu.dimension_semantics<parallel>], iteration_bounds = array<i64: 1>, scalar_prefetch = 0 : i64, scratch_operands = 0 : i64, tpu.core_type = #tpu.core_type<tc>, window_params = [{transform_indices = @transform_0, window_bounds = array<i64: 4, 128>}, {pipeline_mode = #tpu.pipeline_mode<synchronous>, transform_indices = @transform_1, window_bounds = array<i64: 128, 32>}, {transform_indices = @transform_2, window_bounds = array<i64: 128, 32>}]} {
    %0 = tpu.iota {dimensions = array<i32: 0>} : vector<128x128xi32>
    %c0 = arith.constant 0 : index
    %c0_0 = arith.constant 0 : index
    %1 = vector.load %arg1[%c0, %c0_0] : memref<4x128xi32, #tpu.memory_space<vmem>>, vector<1x128xi32>
    %2 = vector.shape_cast %1 : vector<1x128xi32> to vector<128xi32>
    %3 = vector.shape_cast %2 : vector<128xi32> to vector<1x128xi32>
    %4 = vector.broadcast %3 : vector<1x128xi32> to vector<128x128xi32>
    %5 = arith.cmpi eq, %4, %0 : vector<128x128xi32>
    %c1 = arith.constant 1 : index
    %c0_1 = arith.constant 0 : index
    %6 = vector.load %arg1[%c1, %c0_1] : memref<4x128xi32, #tpu.memory_space<vmem>>, vector<1x128xi32>
    %7 = vector.shape_cast %6 : vector<1x128xi32> to vector<128xi32>
    %8 = vector.shape_cast %7 : vector<128xi32> to vector<1x128xi32>
    %9 = vector.broadcast %8 : vector<1x128xi32> to vector<128x128xi32>
    %10 = arith.cmpi eq, %9, %0 : vector<128x128xi32>
    %11 = arith.ori %5, %10 : vector<128x128xi1>
    %c2 = arith.constant 2 : index
    %c0_2 = arith.constant 0 : index
    %12 = vector.load %arg1[%c2, %c0_2] : memref<4x128xi32, #tpu.memory_space<vmem>>, vector<1x128xi32>
    %13 = vector.shape_cast %12 : vector<1x128xi32> to vector<128xi32>
    %14 = vector.shape_cast %13 : vector<128xi32> to vector<1x128xi32>
    %15 = vector.broadcast %14 : vector<1x128xi32> to vector<128x128xi32>
    %16 = arith.cmpi eq, %15, %0 : vector<128x128xi32>
    %17 = arith.ori %11, %16 : vector<128x128xi1>
    %c3 = arith.constant 3 : index
    %c0_3 = arith.constant 0 : index
    %18 = vector.load %arg1[%c3, %c0_3] : memref<4x128xi32, #tpu.memory_space<vmem>>, vector<1x128xi32>
    %19 = vector.shape_cast %18 : vector<1x128xi32> to vector<128xi32>
    %20 = vector.shape_cast %19 : vector<128xi32> to vector<1x128xi32>
    %21 = vector.broadcast %20 : vector<1x128xi32> to vector<128x128xi32>
    %22 = arith.cmpi eq, %21, %0 : vector<128x128xi32>
    %23 = arith.ori %17, %22 : vector<128x128xi1>
    %24 = arith.extui %23 : vector<128x128xi1> to vector<128x128xi32>
    %25 = arith.sitofp %24 : vector<128x128xi32> to vector<128x128xf32>
    %c0_4 = arith.constant 0 : index
    %c0_5 = arith.constant 0 : index
    %26 = vector.load %arg2[%c0_4, %c0_5] : memref<128x32xf32, #tpu.memory_space<vmem>>, vector<128x32xf32>
    %cst = arith.constant dense<0.000000e+00> : vector<128x32xf32>
    %27 = tpu.matmul %25, %26, %cst {dimension_numbers = #tpu.dot_dimension_numbers<[0], [0], [1], [1], [0, 1, 1, 1], [], []>, precision = #tpu.contract_precision<fp32>} : vector<128x128xf32>, vector<128x32xf32>, vector<128x32xf32> -> vector<128x32xf32>
    %c0_6 = arith.constant 0 : index
    %c0_7 = arith.constant 0 : index
    %28 = vector.load %arg3[%c0_6, %c0_7] : memref<128x32xf32, #tpu.memory_space<vmem>>, vector<128x32xf32>
    tpu.vector_store %arg3[%c0_6, %c0_7], %27 {strides = array<i32>} : memref<128x32xf32, #tpu.memory_space<vmem>>, vector<128x32xf32>,
    return
  }
  func.func @transform_0(%arg0: i32) -> (i32, i32) {
    %c0_i32 = arith.constant 0 : i32
    %c0_i32_0 = arith.constant 0 : i32
    return %c0_i32, %arg0 : i32, i32
  }
  func.func @transform_1(%arg0: i32) -> (i32, i32) {
    %c0_i32 = arith.constant 0 : i32
    %c0_i32_0 = arith.constant 0 : i32
    %c0_i32_1 = arith.constant 0 : i32
    return %c0_i32, %c0_i32_0 : i32, i32
  }
  func.func @transform_2(%arg0: i32) -> (i32, i32) {
    %c0_i32 = arith.constant 0 : i32
    %c0_i32_0 = arith.constant 0 : i32
    return %arg0, %c0_i32 : i32, i32
  }
}

</mosaic_0001>

<llo_original>
// kernel: temporal_embedding.1
$region0: #{temporal_embedding.1}
  #allocation0 [shape = 'u32[]', space=smem, size = 0x4, offset = 0x4, fixed_abs, tag = 'smem constant byte address 0x4 - core index']
  #allocation1 [shape = 'u32[144,128]{1,0:T(1,128)}', space=vmem, size = 0x12000, scoped, tag = 'internal scratch']
  %s0 = inlined_call_operand.vmem [shape: s32[4,128], index: 0, kind: input, shape index: {}]
  %s1 = inlined_call_operand.vmem [shape: f32[128,32], index: 1, kind: input, shape index: {}]
  %s2 = inlined_call_operand.vmem [shape: f32[128,32], index: 2, kind: output, shape index: {}]
  %s3 = sld [smem:[#allocation0]]
  $region18: #{temporal_embedding.1} parent=0
    _
  %s5 = ssub.s32 1, %s3
  %s6 = scalar_select 0, %s5, %s3
  // Predicated region
  $region2: #{temporal_embedding.1} parent=0 // pred_check
    _
  $region3: #{temporal_embedding.1} parent=0 // pred_check_branch
    %8 = sbr.rel (0) target = $region5
  $region4: #{temporal_embedding.1} parent=0 // pred_region
    _
  $region5: #{temporal_embedding.1} parent=0 // pred_fallthru
    _
  // Predicated region
  $region6: #{temporal_embedding.1} parent=0 // pred_check
    _
  $region7: #{temporal_embedding.1} parent=0 // pred_check_branch
    %10 = sbr.rel (0) target = $region9
  $region8: #{temporal_embedding.1} parent=0 // pred_region
    _
  $region9: #{temporal_embedding.1} parent=0 // pred_fallthru
    _
  %v11 = vlaneseq
  %v12 = vshrl.u32 %v11, 7
  %v13 = vadd.s32 %v12, 8
  %v14 = vadd.s32 %v12, 16
  %v15 = vadd.s32 %v12, 24
  %v16 = vadd.s32 %v12, 32
  %v17 = vadd.s32 %v12, 40
  %v18 = vadd.s32 %v12, 48
  %v19 = vadd.s32 %v12, 56
  %v20 = vadd.s32 %v12, 64
  %v21 = vadd.s32 %v12, 72
  %v22 = vadd.s32 %v12, 80
  %v23 = vadd.s32 %v12, 88
  %v24 = vadd.s32 %v12, 96
  %v25 = vadd.s32 %v12, 104
  %v26 = vadd.s32 %v12, 112
  %v27 = vadd.s32 %v12, 120
  %v28 = vld [vmem:[%s0] sm:$0x1]
  %v29 = vlaneseq
  %v30 = vshrl.u32 %v29, 7
  %v31 = vsub.s32 0, %v30
  %v32 = vrot.slane %v28, %v31
  %vm33 = vcmp.eq.s32.totalorder %v32, %v12
  %vm34 = vcmp.eq.s32.totalorder %v32, %v13
  %vm35 = vcmp.eq.s32.totalorder %v32, %v14
  %vm36 = vcmp.eq.s32.totalorder %v32, %v15
  %vm37 = vcmp.eq.s32.totalorder %v32, %v16
  %vm38 = vcmp.eq.s32.totalorder %v32, %v17
  %vm39 = vcmp.eq.s32.totalorder %v32, %v18
  %vm40 = vcmp.eq.s32.totalorder %v32, %v19
  %vm41 = vcmp.eq.s32.totalorder %v32, %v20
  %vm42 = vcmp.eq.s32.totalorder %v32, %v21
  %vm43 = vcmp.eq.s32.totalorder %v32, %v22
  %vm44 = vcmp.eq.s32.totalorder %v32, %v23
  %vm45 = vcmp.eq.s32.totalorder %v32, %v24
  %vm46 = vcmp.eq.s32.totalorder %v32, %v25
  %vm47 = vcmp.eq.s32.totalorder %v32, %v26
  %vm48 = vcmp.eq.s32.totalorder %v32, %v27
  %v49 = vld [vmem:[%s0 + $0x1] sm:$0x1]
  %v50 = vlaneseq
  %v51 = vshrl.u32 %v50, 7
  %v52 = vsub.s32 0, %v51
  %v53 = vrot.slane %v49, %v52
  %vm54 = vcmp.eq.s32.totalorder %v53, %v12
  %vm55 = vcmp.eq.s32.totalorder %v53, %v13
  %vm56 = vcmp.eq.s32.totalorder %v53, %v14
  %vm57 = vcmp.eq.s32.totalorder %v53, %v15
  %vm58 = vcmp.eq.s32.totalorder %v53, %v16
  %vm59 = vcmp.eq.s32.totalorder %v53, %v17
  %vm60 = vcmp.eq.s32.totalorder %v53, %v18
  %vm61 = vcmp.eq.s32.totalorder %v53, %v19
  %vm62 = vcmp.eq.s32.totalorder %v53, %v20
  %vm63 = vcmp.eq.s32.totalorder %v53, %v21
  %vm64 = vcmp.eq.s32.totalorder %v53, %v22
  %vm65 = vcmp.eq.s32.totalorder %v53, %v23
  %vm66 = vcmp.eq.s32.totalorder %v53, %v24
  %vm67 = vcmp.eq.s32.totalorder %v53, %v25
  %vm68 = vcmp.eq.s32.totalorder %v53, %v26
  %vm69 = vcmp.eq.s32.totalorder %v53, %v27
  %vm70 = vmor %vm33, %vm54
  %vm71 = vmor %vm34, %vm55
  %vm72 = vmor %vm35, %vm56
  %vm73 = vmor %vm36, %vm57
  %vm74 = vmor %vm37, %vm58
  %vm75 = vmor %vm38, %vm59
  %vm76 = vmor %vm39, %vm60
  %vm77 = vmor %vm40, %vm61
  %vm78 = vmor %vm41, %vm62
  %vm79 = vmor %vm42, %vm63
  %vm80 = vmor %vm43, %vm64
  %vm81 = vmor %vm44, %vm65
  %vm82 = vmor %vm45, %vm66
  %vm83 = vmor %vm46, %vm67
  %vm84 = vmor %vm47, %vm68
  %vm85 = vmor %vm48, %vm69
  %v86 = vld [vmem:[%s0 + $0x2] sm:$0x1]
  %v87 = vlaneseq
  %v88 = vshrl.u32 %v87, 7
  %v89 = vsub.s32 0, %v88
  %v90 = vrot.slane %v86, %v89
  %vm91 = vcmp.eq.s32.totalorder %v90, %v12
  %vm92 = vcmp.eq.s32.totalorder %v90, %v13
  %vm93 = vcmp.eq.s32.totalorder %v90, %v14
  %vm94 = vcmp.eq.s32.totalorder %v90, %v15
  %vm95 = vcmp.eq.s32.totalorder %v90, %v16
  %vm96 = vcmp.eq.s32.totalorder %v90, %v17
  %vm97 = vcmp.eq.s32.totalorder %v90, %v18
  %vm98 = vcmp.eq.s32.totalorder %v90, %v19
  %vm99 = vcmp.eq.s32.totalorder %v90, %v20
  %vm100 = vcmp.eq.s32.totalorder %v90, %v21
  %vm101 = vcmp.eq.s32.totalorder %v90, %v22
  %vm102 = vcmp.eq.s32.totalorder %v90, %v23
  %vm103 = vcmp.eq.s32.totalorder %v90, %v24
  %vm104 = vcmp.eq.s32.totalorder %v90, %v25
  %vm105 = vcmp.eq.s32.totalorder %v90, %v26
  %vm106 = vcmp.eq.s32.totalorder %v90, %v27
  %vm107 = vmor %vm70, %vm91
  %vm108 = vmor %vm71, %vm92
  %vm109 = vmor %vm72, %vm93
  %vm110 = vmor %vm73, %vm94
  %vm111 = vmor %vm74, %vm95
  %vm112 = vmor %vm75, %vm96
  %vm113 = vmor %vm76, %vm97
  %vm114 = vmor %vm77, %vm98
  %vm115 = vmor %vm78, %vm99
  %vm116 = vmor %vm79, %vm100
  %vm117 = vmor %vm80, %vm101
  %vm118 = vmor %vm81, %vm102
  %vm119 = vmor %vm82, %vm103
  %vm120 = vmor %vm83, %vm104
  %vm121 = vmor %vm84, %vm105
  %vm122 = vmor %vm85, %vm106
  %v123 = vld [vmem:[%s0 + $0x3] sm:$0x1]
  %v124 = vlaneseq
  %v125 = vshrl.u32 %v124, 7
  %v126 = vsub.s32 0, %v125
  %v127 = vrot.slane %v123, %v126
  %vm128 = vcmp.eq.s32.totalorder %v127, %v12
  %vm129 = vcmp.eq.s32.totalorder %v127, %v13
  %vm130 = vcmp.eq.s32.totalorder %v127, %v14
  %vm131 = vcmp.eq.s32.totalorder %v127, %v15
  %vm132 = vcmp.eq.s32.totalorder %v127, %v16
  %vm133 = vcmp.eq.s32.totalorder %v127, %v17
  %vm134 = vcmp.eq.s32.totalorder %v127, %v18
  %vm135 = vcmp.eq.s32.totalorder %v127, %v19
  %vm136 = vcmp.eq.s32.totalorder %v127, %v20
  %vm137 = vcmp.eq.s32.totalorder %v127, %v21
  %vm138 = vcmp.eq.s32.totalorder %v127, %v22
  %vm139 = vcmp.eq.s32.totalorder %v127, %v23
  %vm140 = vcmp.eq.s32.totalorder %v127, %v24
  %vm141 = vcmp.eq.s32.totalorder %v127, %v25
  %vm142 = vcmp.eq.s32.totalorder %v127, %v26
  %vm143 = vcmp.eq.s32.totalorder %v127, %v27
  %vm144 = vmor %vm107, %vm128
  %vm145 = vmor %vm108, %vm129
  %vm146 = vmor %vm109, %vm130
  %vm147 = vmor %vm110, %vm131
  %vm148 = vmor %vm111, %vm132
  %vm149 = vmor %vm112, %vm133
  %vm150 = vmor %vm113, %vm134
  %vm151 = vmor %vm114, %vm135
  %vm152 = vmor %vm115, %vm136
  %vm153 = vmor %vm116, %vm137
  %vm154 = vmor %vm117, %vm138
  %vm155 = vmor %vm118, %vm139
  %vm156 = vmor %vm119, %vm140
  %vm157 = vmor %vm120, %vm141
  %vm158 = vmor %vm121, %vm142
  %vm159 = vmor %vm122, %vm143
  %v160 = vsel %vm144, 1, 0
  %v161 = vsel %vm145, 1, 0
  %v162 = vsel %vm146, 1, 0
  %v163 = vsel %vm147, 1, 0
  %v164 = vsel %vm148, 1, 0
  %v165 = vsel %vm149, 1, 0
  %v166 = vsel %vm150, 1, 0
  %v167 = vsel %vm151, 1, 0
  %v168 = vsel %vm152, 1, 0
  %v169 = vsel %vm153, 1, 0
  %v170 = vsel %vm154, 1, 0
  %v171 = vsel %vm155, 1, 0
  %v172 = vsel %vm156, 1, 0
  %v173 = vsel %vm157, 1, 0
  %v174 = vsel %vm158, 1, 0
  %v175 = vsel %vm159, 1, 0
  %v176 = vcvt.s32.f32 %v160
  %v177 = vcvt.s32.f32 %v161
  %v178 = vcvt.s32.f32 %v162
  %v179 = vcvt.s32.f32 %v163
  %v180 = vcvt.s32.f32 %v164
  %v181 = vcvt.s32.f32 %v165
  %v182 = vcvt.s32.f32 %v166
  %v183 = vcvt.s32.f32 %v167
  %v184 = vcvt.s32.f32 %v168
  %v185 = vcvt.s32.f32 %v169
  %v186 = vcvt.s32.f32 %v170
  %v187 = vcvt.s32.f32 %v171
  %v188 = vcvt.s32.f32 %v172
  %v189 = vcvt.s32.f32 %v173
  %v190 = vcvt.s32.f32 %v174
  %v191 = vcvt.s32.f32 %v175
  %v192 = vld [vmem:[%s1] sm:$0xff]
  %v193 = vld [vmem:[%s1 + $0x8] sm:$0xff]
  %v194 = vld [vmem:[%s1 + $0x10] sm:$0xff]
  %v195 = vld [vmem:[%s1 + $0x18] sm:$0xff]
  %v196 = vld [vmem:[%s1 + $0x20] sm:$0xff]
  %v197 = vld [vmem:[%s1 + $0x28] sm:$0xff]
  %v198 = vld [vmem:[%s1 + $0x30] sm:$0xff]
  %v199 = vld [vmem:[%s1 + $0x38] sm:$0xff]
  %v200 = vld [vmem:[%s1 + $0x40] sm:$0xff]
  %v201 = vld [vmem:[%s1 + $0x48] sm:$0xff]
  %v202 = vld [vmem:[%s1 + $0x50] sm:$0xff]
  %v203 = vld [vmem:[%s1 + $0x58] sm:$0xff]
  %v204 = vld [vmem:[%s1 + $0x60] sm:$0xff]
  %v205 = vld [vmem:[%s1 + $0x68] sm:$0xff]
  %v206 = vld [vmem:[%s1 + $0x70] sm:$0xff]
  %v207 = vld [vmem:[%s1 + $0x78] sm:$0xff]
  %208 = vxpose.xlu0.b32.start [1/16] %v176, 128
  %209 = vxpose.xlu0.b32.cont [2/16] %v177, 128
  %210 = vxpose.xlu0.b32.cont [3/16] %v178, 128
  %211 = vxpose.xlu0.b32.cont [4/16] %v179, 128
  %212 = vxpose.xlu0.b32.cont [5/16] %v180, 128
  %213 = vxpose.xlu0.b32.cont [6/16] %v181, 128
  %214 = vxpose.xlu0.b32.cont [7/16] %v182, 128
  %215 = vxpose.xlu0.b32.cont [8/16] %v183, 128
  %216 = vxpose.xlu0.b32.cont [9/16] %v184, 128
  %217 = vxpose.xlu0.b32.cont [10/16] %v185, 128
  %218 = vxpose.xlu0.b32.cont [11/16] %v186, 128
  %219 = vxpose.xlu0.b32.cont [12/16] %v187, 128
  %220 = vxpose.xlu0.b32.cont [13/16] %v188, 128
  %221 = vxpose.xlu0.b32.cont [14/16] %v189, 128
  %222 = vxpose.xlu0.b32.cont [15/16] %v190, 128
  %223 = vxpose.xlu0.b32.end [16/16] %v191, 128
  %v224 = vpop.trf.xlu0
  %v225 = vpop.trf.xlu0
  %v226 = vpop.trf.xlu0
  %v227 = vpop.trf.xlu0
  %v228 = vpop.trf.xlu0
  %v229 = vpop.trf.xlu0
  %v230 = vpop.trf.xlu0
  %v231 = vpop.trf.xlu0
  %v232 = vpop.trf.xlu0
  %v233 = vpop.trf.xlu0
  %v234 = vpop.trf.xlu0
  %v235 = vpop.trf.xlu0
  %v236 = vpop.trf.xlu0
  %v237 = vpop.trf.xlu0
  %v238 = vpop.trf.xlu0
  %v239 = vpop.trf.xlu0
  %240 = vmatprep.subr.mxu0 0.0
  %v241 = vand.u32 %v192, 4294901760
  %242 = vmatpush1.msra.mxu0 %v241
  %243 = vmatprep.subr.mxu0 0.0
  %v244 = vand.u32 %v193, 4294901760
  %245 = vmatpush1.msra.mxu0 %v244
  %246 = vmatprep.subr.mxu0 0.0
  %v247 = vand.u32 %v194, 4294901760
  %248 = vmatpush1.msra.mxu0 %v247
  %249 = vmatprep.subr.mxu0 0.0
  %v250 = vand.u32 %v195, 4294901760
  %251 = vmatpush1.msra.mxu0 %v250
  %252 = vmatprep.subr.mxu0 0.0
  %v253 = vand.u32 %v196, 4294901760
  %254 = vmatpush1.msra.mxu0 %v253
  %255 = vmatprep.subr.mxu0 0.0
  %v256 = vand.u32 %v197, 4294901760
  %257 = vmatpush1.msra.mxu0 %v256
  %258 = vmatprep.subr.mxu0 0.0
  %v259 = vand.u32 %v198, 4294901760
  %260 = vmatpush1.msra.mxu0 %v259
  %261 = vmatprep.subr.mxu0 0.0
  %v262 = vand.u32 %v199, 4294901760
  %263 = vmatpush1.msra.mxu0 %v262
  %264 = vmatprep.subr.mxu0 0.0
  %v265 = vand.u32 %v200, 4294901760
  %266 = vmatpush1.msra.mxu0 %v265
  %267 = vmatprep.subr.mxu0 0.0
  %v268 = vand.u32 %v201, 4294901760
  %269 = vmatpush1.msra.mxu0 %v268
  %270 = vmatprep.subr.mxu0 0.0
  %v271 = vand.u32 %v202, 4294901760
  %272 = vmatpush1.msra.mxu0 %v271
  %273 = vmatprep.subr.mxu0 0.0
  %v274 = vand.u32 %v203, 4294901760
  %275 = vmatpush1.msra.mxu0 %v274
  %276 = vmatprep.subr.mxu0 0.0
  %v277 = vand.u32 %v204, 4294901760
  %278 = vmatpush1.msra.mxu0 %v277
  %279 = vmatprep.subr.mxu0 0.0
  %v280 = vand.u32 %v205, 4294901760
  %281 = vmatpush1.msra.mxu0 %v280
  %282 = vmatprep.subr.mxu0 0.0
  %v283 = vand.u32 %v206, 4294901760
  %284 = vmatpush1.msra.mxu0 %v283
  %285 = vmatprep.subr.mxu0 0.0
  %v286 = vand.u32 %v207, 4294901760
  %287 = vmatpush1.msra.mxu0 %v286
  %288 = vmatprep.subr.mxu0 0.0
  %289 = vmatpush1.msra.mxu0 0.0
  %290 = vmatprep.subr.mxu0 0.0
  %291 = vmatpush1.msra.mxu0 0.0
  %292 = vmatprep.subr.mxu0 0.0
  %293 = vmatpush1.msra.mxu0 0.0
  %294 = vmatprep.subr.mxu0 0.0
  %295 = vmatpush1.msra.mxu0 0.0
  %296 = vmatprep.subr.mxu0 0.0
  %297 = vmatpush1.msra.mxu0 0.0
  %298 = vmatprep.subr.mxu0 0.0
  %299 = vmatpush1.msra.mxu0 0.0
  %300 = vmatprep.subr.mxu0 0.0
  %301 = vmatpush1.msra.mxu0 0.0
  %302 = vmatprep.subr.mxu0 0.0
  %303 = vmatpush1.msra.mxu0 0.0
  %304 = vmatprep.subr.mxu0 0.0
  %305 = vmatpush1.msra.mxu0 0.0
  %306 = vmatprep.subr.mxu0 0.0
  %307 = vmatpush1.msra.mxu0 0.0
  %308 = vmatprep.subr.mxu0 0.0
  %309 = vmatpush1.msra.mxu0 0.0
  %310 = vmatprep.subr.mxu0 0.0
  %311 = vmatpush1.msra.mxu0 0.0
  %312 = vmatprep.subr.mxu0 0.0
  %313 = vmatpush1.msra.mxu0 0.0
  %314 = vmatprep.subr.mxu0 0.0
  %315 = vmatpush1.msra.mxu0 0.0
  %316 = vmatprep.subr.mxu0 0.0
  %317 = vmatpush1.msra.mxu0 0.0
  %318 = vmatprep.subr.mxu0 0.0
  %319 = vmatpush1.msra.mxu0 0.0
  %320 = vmatprep.mubr.f32.mxu0 0.0
  %v321 = vand.u32 %v224, 4294901760
  %v322 = vsub.f32 %v224, %v321
  %v323 = vand.u32 %v322, 4294901760
  %v324 = vsub.f32 %v322, %v323
  %v325 = vand.u32 %v324, 4294901760
  %326 = vmatmul.mubr.f32.gmra.mrb[0].mxu0 %v325
  %v327 = vpop.f32.mrb[0].mxu0
  %v328 = vadd.f32 0.0, %v327
  %v329 = vpop.f32.mrb[0].mxu0
  %330 = vmatprep.mubr.f32.mxu0 0.0
  %v331 = vand.u32 %v225, 4294901760
  %v332 = vsub.f32 %v225, %v331
  %v333 = vand.u32 %v332, 4294901760
  %v334 = vsub.f32 %v332, %v333
  %v335 = vand.u32 %v334, 4294901760
  %336 = vmatmul.mubr.f32.gmra.mrb[0].mxu0 %v335
  %v337 = vpop.f32.mrb[0].mxu0
  %v338 = vadd.f32 0.0, %v337
  %v339 = vpop.f32.mrb[0].mxu0
  %340 = vmatprep.mubr.f32.mxu0 0.0
  %v341 = vand.u32 %v226, 4294901760
  %v342 = vsub.f32 %v226, %v341
  %v343 = vand.u32 %v342, 4294901760
  %v344 = vsub.f32 %v342, %v343
  %v345 = vand.u32 %v344, 4294901760
  %346 = vmatmul.mubr.f32.gmra.mrb[0].mxu0 %v345
  %v347 = vpop.f32.mrb[0].mxu0
  %v348 = vadd.f32 0.0, %v347
  %v349 = vpop.f32.mrb[0].mxu0
  %350 = vmatprep.mubr.f32.mxu0 0.0
  %v351 = vand.u32 %v227, 4294901760
  %v352 = vsub.f32 %v227, %v351
  %v353 = vand.u32 %v352, 4294901760
  %v354 = vsub.f32 %v352, %v353
  %v355 = vand.u32 %v354, 4294901760
  %356 = vmatmul.mubr.f32.gmra.mrb[0].mxu0 %v355
  %v357 = vpop.f32.mrb[0].mxu0
  %v358 = vadd.f32 0.0, %v357
  %v359 = vpop.f32.mrb[0].mxu0
  %360 = vmatprep.mubr.f32.mxu0 0.0
  %v361 = vand.u32 %v228, 4294901760
  %v362 = vsub.f32 %v228, %v361
  %v363 = vand.u32 %v362, 4294901760
  %v364 = vsub.f32 %v362, %v363
  %v365 = vand.u32 %v364, 4294901760
  %366 = vmatmul.mubr.f32.gmra.mrb[0].mxu0 %v365
  %v367 = vpop.f32.mrb[0].mxu0
  %v368 = vadd.f32 0.0, %v367
  %v369 = vpop.f32.mrb[0].mxu0
  %370 = vmatprep.mubr.f32.mxu0 0.0
  %v371 = vand.u32 %v229, 4294901760
  %v372 = vsub.f32 %v229, %v371
  %v373 = vand.u32 %v372, 4294901760
  %v374 = vsub.f32 %v372, %v373
  %v375 = vand.u32 %v374, 4294901760
  %376 = vmatmul.mubr.f32.gmra.mrb[0].mxu0 %v375
  %v377 = vpop.f32.mrb[0].mxu0
  %v378 = vadd.f32 0.0, %v377
  %v379 = vpop.f32.mrb[0].mxu0
  %380 = vmatprep.mubr.f32.mxu0 0.0
  %v381 = vand.u32 %v230, 4294901760
  %v382 = vsub.f32 %v230, %v381
  %v383 = vand.u32 %v382, 4294901760
  %v384 = vsub.f32 %v382, %v383
  %v385 = vand.u32 %v384, 4294901760
  %386 = vmatmul.mubr.f32.gmra.mrb[0].mxu0 %v385
  %v387 = vpop.f32.mrb[0].mxu0
  %v388 = vadd.f32 0.0, %v387
  %v389 = vpop.f32.mrb[0].mxu0
  %390 = vmatprep.mubr.f32.mxu0 0.0
  %v391 = vand.u32 %v231, 4294901760
  %v392 = vsub.f32 %v231, %v391
  %v393 = vand.u32 %v392, 4294901760
  %v394 = vsub.f32 %v392, %v393
  %v395 = vand.u32 %v394, 4294901760
  %396 = vmatmul.mubr.f32.gmra.mrb[0].mxu0 %v395
  %v397 = vpop.f32.mrb[0].mxu0
  %v398 = vadd.f32 0.0, %v397
  %v399 = vpop.f32.mrb[0].mxu0
  %400 = vmatprep.mubr.f32.mxu0 0.0
  %v401 = vand.u32 %v232, 4294901760
  %v402 = vsub.f32 %v232, %v401
  %v403 = vand.u32 %v402, 4294901760
  %v404 = vsub.f32 %v402, %v403
  %v405 = vand.u32 %v404, 4294901760
  %406 = vmatmul.mubr.f32.gmra.mrb[0].mxu0 %v405
  %v407 = vpop.f32.mrb[0].mxu0
  %v408 = vadd.f32 0.0, %v407
  %v409 = vpop.f32.mrb[0].mxu0
  %410 = vmatprep.mubr.f32.mxu0 0.0
  %v411 = vand.u32 %v233, 4294901760
  %v412 = vsub.f32 %v233, %v411
  %v413 = vand.u32 %v412, 4294901760
  %v414 = vsub.f32 %v412, %v413
  %v415 = vand.u32 %v414, 4294901760
  %416 = vmatmul.mubr.f32.gmra.mrb[0].mxu0 %v415
  %v417 = vpop.f32.mrb[0].mxu0
  %v418 = vadd.f32 0.0, %v417
  %v419 = vpop.f32.mrb[0].mxu0
  %420 = vmatprep.mubr.f32.mxu0 0.0
  %v421 = vand.u32 %v234, 4294901760
  %v422 = vsub.f32 %v234, %v421
  %v423 = vand.u32 %v422, 4294901760
  %v424 = vsub.f32 %v422, %v423
  %v425 = vand.u32 %v424, 4294901760
  %426 = vmatmul.mubr.f32.gmra.mrb[0].mxu0 %v425
  %v427 = vpop.f32.mrb[0].mxu0
  %v428 = vadd.f32 0.0, %v427
  %v429 = vpop.f32.mrb[0].mxu0
  %430 = vmatprep.mubr.f32.mxu0 0.0
  %v431 = vand.u32 %v235, 4294901760
  %v432 = vsub.f32 %v235, %v431
  %v433 = vand.u32 %v432, 4294901760
  %v434 = vsub.f32 %v432, %v433
  %v435 = vand.u32 %v434, 4294901760
  %436 = vmatmul.mubr.f32.gmra.mrb[0].mxu0 %v435
  %v437 = vpop.f32.mrb[0].mxu0
  %v438 = vadd.f32 0.0, %v437
  %v439 = vpop.f32.mrb[0].mxu0
  %440 = vmatprep.mubr.f32.mxu0 0.0
  %v441 = vand.u32 %v236, 4294901760
  %v442 = vsub.f32 %v236, %v441
  %v443 = vand.u32 %v442, 4294901760
  %v444 = vsub.f32 %v442, %v443
  %v445 = vand.u32 %v444, 4294901760
  %446 = vmatmul.mubr.f32.gmra.mrb[0].mxu0 %v445
  %v447 = vpop.f32.mrb[0].mxu0
  %v448 = vadd.f32 0.0, %v447
  %v449 = vpop.f32.mrb[0].mxu0
  %450 = vmatprep.mubr.f32.mxu0 0.0
  %v451 = vand.u32 %v237, 4294901760
  %v452 = vsub.f32 %v237, %v451
  %v453 = vand.u32 %v452, 4294901760
  %v454 = vsub.f32 %v452, %v453
  %v455 = vand.u32 %v454, 4294901760
  %456 = vmatmul.mubr.f32.gmra.mrb[0].mxu0 %v455
  %v457 = vpop.f32.mrb[0].mxu0
  %v458 = vadd.f32 0.0, %v457
  %v459 = vpop.f32.mrb[0].mxu0
  %460 = vmatprep.mubr.f32.mxu0 0.0
  %v461 = vand.u32 %v238, 4294901760
  %v462 = vsub.f32 %v238, %v461
  %v463 = vand.u32 %v462, 4294901760
  %v464 = vsub.f32 %v462, %v463
  %v465 = vand.u32 %v464, 4294901760
  %466 = vmatmul.mubr.f32.gmra.mrb[0].mxu0 %v465
  %v467 = vpop.f32.mrb[0].mxu0
  %v468 = vadd.f32 0.0, %v467
  %v469 = vpop.f32.mrb[0].mxu0
  %470 = vmatprep.mubr.f32.mxu0 0.0
  %v471 = vand.u32 %v239, 4294901760
  %v472 = vsub.f32 %v239, %v471
  %v473 = vand.u32 %v472, 4294901760
  %v474 = vsub.f32 %v472, %v473
  %v475 = vand.u32 %v474, 4294901760
  %476 = vmatmul.mubr.f32.gmra.mrb[0].mxu0 %v475
  %v477 = vpop.f32.mrb[0].mxu0
  %v478 = vadd.f32 0.0, %v477
  %v479 = vpop.f32.mrb[0].mxu0
  %480 = vdwg.mxu0
  %481 = vmatprep.subr.mxu0 0.0
  %v482 = vand.u32 %v192, 4294901760
  %v483 = vsub.f32 %v192, %v482
  %v484 = vand.u32 %v483, 4294901760
  %v485 = vsub.f32 %v483, %v484
  %v486 = vand.u32 %v485, 4294901760
  %487 = vmatpush1.msra.mxu0 %v486
  %488 = vmatprep.subr.mxu0 0.0
  %v489 = vand.u32 %v193, 4294901760
  %v490 = vsub.f32 %v193, %v489
  %v491 = vand.u32 %v490, 4294901760
  %v492 = vsub.f32 %v490, %v491
  %v493 = vand.u32 %v492, 4294901760
  %494 = vmatpush1.msra.mxu0 %v493
  %495 = vmatprep.subr.mxu0 0.0
  %v496 = vand.u32 %v194, 4294901760
  %v497 = vsub.f32 %v194, %v496
  %v498 = vand.u32 %v497, 4294901760
  %v499 = vsub.f32 %v497, %v498
  %v500 = vand.u32 %v499, 4294901760
  %501 = vmatpush1.msra.mxu0 %v500
  %502 = vmatprep.subr.mxu0 0.0
  %v503 = vand.u32 %v195, 4294901760
  %v504 = vsub.f32 %v195, %v503
  %v505 = vand.u32 %v504, 4294901760
  %v506 = vsub.f32 %v504, %v505
  %v507 = vand.u32 %v506, 4294901760
  %508 = vmatpush1.msra.mxu0 %v507
  %509 = vmatprep.subr.mxu0 0.0
  %v510 = vand.u32 %v196, 4294901760
  %v511 = vsub.f32 %v196, %v510
  %v512 = vand.u32 %v511, 4294901760
  %v513 = vsub.f32 %v511, %v512
  %v514 = vand.u32 %v513, 4294901760
  %515 = vmatpush1.msra.mxu0 %v514
  %516 = vmatprep.subr.mxu0 0.0
  %v517 = vand.u32 %v197, 4294901760
  %v518 = vsub.f32 %v197, %v517
  %v519 = vand.u32 %v518, 4294901760
  %v520 = vsub.f32 %v518, %v519
  %v521 = vand.u32 %v520, 4294901760
  %522 = vmatpush1.msra.mxu0 %v521
  %523 = vmatprep.subr.mxu0 0.0
  %v524 = vand.u32 %v198, 4294901760
  %v525 = vsub.f32 %v198, %v524
  %v526 = vand.u32 %v525, 4294901760
  %v527 = vsub.f32 %v525, %v526
  %v528 = vand.u32 %v527, 4294901760
  %529 = vmatpush1.msra.mxu0 %v528
  %530 = vmatprep.subr.mxu0 0.0
  %v531 = vand.u32 %v199, 4294901760
  %v532 = vsub.f32 %v199, %v531
  %v533 = vand.u32 %v532, 4294901760
  %v534 = vsub.f32 %v532, %v533
  %v535 = vand.u32 %v534, 4294901760
  %536 = vmatpush1.msra.mxu0 %v535
  %537 = vmatprep.subr.mxu0 0.0
  %v538 = vand.u32 %v200, 4294901760
  %v539 = vsub.f32 %v200, %v538
  %v540 = vand.u32 %v539, 4294901760
  %v541 = vsub.f32 %v539, %v540
  %v542 = vand.u32 %v541, 4294901760
  %543 = vmatpush1.msra.mxu0 %v542
  %544 = vmatprep.subr.mxu0 0.0
  %v545 = vand.u32 %v201, 4294901760
  %v546 = vsub.f32 %v201, %v545
  %v547 = vand.u32 %v546, 4294901760
  %v548 = vsub.f32 %v546, %v547
  %v549 = vand.u32 %v548, 4294901760
  %550 = vmatpush1.msra.mxu0 %v549
  %551 = vmatprep.subr.mxu0 0.0
  %v552 = vand.u32 %v202, 4294901760
  %v553 = vsub.f32 %v202, %v552
  %v554 = vand.u32 %v553, 4294901760
  %v555 = vsub.f32 %v553, %v554
  %v556 = vand.u32 %v555, 4294901760
  %557 = vmatpush1.msra.mxu0 %v556
  %558 = vmatprep.subr.mxu0 0.0
  %v559 = vand.u32 %v203, 4294901760
  %v560 = vsub.f32 %v203, %v559
  %v561 = vand.u32 %v560, 4294901760
  %v562 = vsub.f32 %v560, %v561
  %v563 = vand.u32 %v562, 4294901760
  %564 = vmatpush1.msra.mxu0 %v563
  %565 = vmatprep.subr.mxu0 0.0
  %v566 = vand.u32 %v204, 4294901760
  %v567 = vsub.f32 %v204, %v566
  %v568 = vand.u32 %v567, 4294901760
  %v569 = vsub.f32 %v567, %v568
  %v570 = vand.u32 %v569, 4294901760
  %571 = vmatpush1.msra.mxu0 %v570
  %572 = vmatprep.subr.mxu0 0.0
  %v573 = vand.u32 %v205, 4294901760
  %v574 = vsub.f32 %v205, %v573
  %v575 = vand.u32 %v574, 4294901760
  %v576 = vsub.f32 %v574, %v575
  %v577 = vand.u32 %v576, 4294901760
  %578 = vmatpush1.msra.mxu0 %v577
  %579 = vmatprep.subr.mxu0 0.0
  %v580 = vand.u32 %v206, 4294901760
  %v581 = vsub.f32 %v206, %v580
  %v582 = vand.u32 %v581, 4294901760
  %v583 = vsub.f32 %v581, %v582
  %v584 = vand.u32 %v583, 4294901760
  %585 = vmatpush1.msra.mxu0 %v584
  %586 = vmatprep.subr.mxu0 0.0
  %v587 = vand.u32 %v207, 4294901760
  %v588 = vsub.f32 %v207, %v587
  %v589 = vand.u32 %v588, 4294901760
  %v590 = vsub.f32 %v588, %v589
  %v591 = vand.u32 %v590, 4294901760
  %592 = vmatpush1.msra.mxu0 %v591
  %593 = vmatprep.subr.mxu0 0.0
  %594 = vmatpush1.msra.mxu0 0.0
  %595 = vmatprep.subr.mxu0 0.0
  %596 = vmatpush1.msra.mxu0 0.0
  %597 = vmatprep.subr.mxu0 0.0
  %598 = vmatpush1.msra.mxu0 0.0
  %599 = vmatprep.subr.mxu0 0.0
  %600 = vmatpush1.msra.mxu0 0.0
  %601 = vmatprep.subr.mxu0 0.0
  %602 = vmatpush1.msra.mxu0 0.0
  %603 = vmatprep.subr.mxu0 0.0
  %604 = vmatpush1.msra.mxu0 0.0
  %605 = vmatprep.subr.mxu0 0.0
  %606 = vmatpush1.msra.mxu0 0.0
  %607 = vmatprep.subr.mxu0 0.0
  %608 = vmatpush1.msra.mxu0 0.0
  %609 = vmatprep.subr.mxu0 0.0
  %610 = vmatpush1.msra.mxu0 0.0
  %611 = vmatprep.subr.mxu0 0.0
  %612 = vmatpush1.msra.mxu0 0.0
  %613 = vmatprep.subr.mxu0 0.0
  %614 = vmatpush1.msra.mxu0 0.0
  %615 = vmatprep.subr.mxu0 0.0
  %616 = vmatpush1.msra.mxu0 0.0
  %617 = vmatprep.subr.mxu0 0.0
  %618 = vmatpush1.msra.mxu0 0.0
  %619 = vmatprep.subr.mxu0 0.0
  %620 = vmatpush1.msra.mxu0 0.0
  %621 = vmatprep.subr.mxu0 0.0
  %622 = vmatpush1.msra.mxu0 0.0
  %623 = vmatprep.subr.mxu0 0.0
  %624 = vmatpush1.msra.mxu0 0.0
  %625 = vmatprep.mubr.f32.mxu0 0.0
  %v626 = vand.u32 %v224, 4294901760
  %627 = vmatmul.mubr.f32.gmra.mrb[0].mxu0 %v626
  %v628 = vpop.f32.mrb[0].mxu0
  %v629 = vadd.f32 %v328, %v628
  %v630 = vpop.f32.mrb[0].mxu0
  %631 = vmatprep.mubr.f32.mxu0 0.0
  %v632 = vand.u32 %v225, 4294901760
  %633 = vmatmul.mubr.f32.gmra.mrb[0].mxu0 %v632
  %v634 = vpop.f32.mrb[0].mxu0
  %v635 = vadd.f32 %v338, %v634
  %v636 = vpop.f32.mrb[0].mxu0
  %637 = vmatprep.mubr.f32.mxu0 0.0
  %v638 = vand.u32 %v226, 4294901760
  %639 = vmatmul.mubr.f32.gmra.mrb[0].mxu0 %v638
  %v640 = vpop.f32.mrb[0].mxu0
  %v641 = vadd.f32 %v348, %v640
  %v642 = vpop.f32.mrb[0].mxu0
  %643 = vmatprep.mubr.f32.mxu0 0.0
  %v644 = vand.u32 %v227, 4294901760
  %645 = vmatmul.mubr.f32.gmra.mrb[0].mxu0 %v644
  %v646 = vpop.f32.mrb[0].mxu0
  %v647 = vadd.f32 %v358, %v646
  %v648 = vpop.f32.mrb[0].mxu0
  %649 = vmatprep.mubr.f32.mxu0 0.0
  %v650 = vand.u32 %v228, 4294901760
  %651 = vmatmul.mubr.f32.gmra.mrb[0].mxu0 %v650
  %v652 = vpop.f32.mrb[0].mxu0
  %v653 = vadd.f32 %v368, %v652
  %v654 = vpop.f32.mrb[0].mxu0
  %655 = vmatprep.mubr.f32.mxu0 0.0
  %v656 = vand.u32 %v229, 4294901760
  %657 = vmatmul.mubr.f32.gmra.mrb[0].mxu0 %v656
  %v658 = vpop.f32.mrb[0].mxu0
  %v659 = vadd.f32 %v378, %v658
  %v660 = vpop.f32.mrb[0].mxu0
  %661 = vmatprep.mubr.f32.mxu0 0.0
  %v662 = vand.u32 %v230, 4294901760
  %663 = vmatmul.mubr.f32.gmra.mrb[0].mxu0 %v662
  %v664 = vpop.f32.mrb[0].mxu0
  %v665 = vadd.f32 %v388, %v664
  %v666 = vpop.f32.mrb[0].mxu0
  %667 = vmatprep.mubr.f32.mxu0 0.0
  %v668 = vand.u32 %v231, 4294901760
  %669 = vmatmul.mubr.f32.gmra.mrb[0].mxu0 %v668
  %v670 = vpop.f32.mrb[0].mxu0
  %v671 = vadd.f32 %v398, %v670
  %v672 = vpop.f32.mrb[0].mxu0
  %673 = vmatprep.mubr.f32.mxu0 0.0
  %v674 = vand.u32 %v232, 4294901760
  %675 = vmatmul.mubr.f32.gmra.mrb[0].mxu0 %v674
  %v676 = vpop.f32.mrb[0].mxu0
  %v677 = vadd.f32 %v408, %v676
  %v678 = vpop.f32.mrb[0].mxu0
  %679 = vmatprep.mubr.f32.mxu0 0.0
  %v680 = vand.u32 %v233, 4294901760
  %681 = vmatmul.mubr.f32.gmra.mrb[0].mxu0 %v680
  %v682 = vpop.f32.mrb[0].mxu0
  %v683 = vadd.f32 %v418, %v682
  %v684 = vpop.f32.mrb[0].mxu0
  %685 = vmatprep.mubr.f32.mxu0 0.0
  %v686 = vand.u32 %v234, 4294901760
  %687 = vmatmul.mubr.f32.gmra.mrb[0].mxu0 %v686
  %v688 = vpop.f32.mrb[0].mxu0
  %v689 = vadd.f32 %v428, %v688
  %v690 = vpop.f32.mrb[0].mxu0
  %691 = vmatprep.mubr.f32.mxu0 0.0
  %v692 = vand.u32 %v235, 4294901760
  %693 = vmatmul.mubr.f32.gmra.mrb[0].mxu0 %v692
  %v694 = vpop.f32.mrb[0].mxu0
  %v695 = vadd.f32 %v438, %v694
  %v696 = vpop.f32.mrb[0].mxu0
  %697 = vmatprep.mubr.f32.mxu0 0.0
  %v698 = vand.u32 %v236, 4294901760
  %699 = vmatmul.mubr.f32.gmra.mrb[0].mxu0 %v698
  %v700 = vpop.f32.mrb[0].mxu0
  %v701 = vadd.f32 %v448, %v700
  %v702 = vpop.f32.mrb[0].mxu0
  %703 = vmatprep.mubr.f32.mxu0 0.0
  %v704 = vand.u32 %v237, 4294901760
  %705 = vmatmul.mubr.f32.gmra.mrb[0].mxu0 %v704
  %v706 = vpop.f32.mrb[0].mxu0
  %v707 = vadd.f32 %v458, %v706
  %v708 = vpop.f32.mrb[0].mxu0
  %709 = vmatprep.mubr.f32.mxu0 0.0
  %v710 = vand.u32 %v238, 4294901760
  %711 = vmatmul.mubr.f32.gmra.mrb[0].mxu0 %v710
  %v712 = vpop.f32.mrb[0].mxu0
  %v713 = vadd.f32 %v468, %v712
  %v714 = vpop.f32.mrb[0].mxu0
  %715 = vmatprep.mubr.f32.mxu0 0.0
  %v716 = vand.u32 %v239, 4294901760
  %717 = vmatmul.mubr.f32.gmra.mrb[0].mxu0 %v716
  %v718 = vpop.f32.mrb[0].mxu0
  %v719 = vadd.f32 %v478, %v718
  %v720 = vpop.f32.mrb[0].mxu0
  %721 = vdwg.mxu0
  %722 = vmatprep.subr.mxu0 0.0
  %v723 = vand.u32 %v192, 4294901760
  %v724 = vsub.f32 %v192, %v723
  %725 = vmatpush1.msra.mxu0 %v724
  %726 = vmatprep.subr.mxu0 0.0
  %v727 = vand.u32 %v193, 4294901760
  %v728 = vsub.f32 %v193, %v727
  %729 = vmatpush1.msra.mxu0 %v728
  %730 = vmatprep.subr.mxu0 0.0
  %v731 = vand.u32 %v194, 4294901760
  %v732 = vsub.f32 %v194, %v731
  %733 = vmatpush1.msra.mxu0 %v732
  %734 = vmatprep.subr.mxu0 0.0
  %v735 = vand.u32 %v195, 4294901760
  %v736 = vsub.f32 %v195, %v735
  %737 = vmatpush1.msra.mxu0 %v736
  %738 = vmatprep.subr.mxu0 0.0
  %v739 = vand.u32 %v196, 4294901760
  %v740 = vsub.f32 %v196, %v739
  %741 = vmatpush1.msra.mxu0 %v740
  %742 = vmatprep.subr.mxu0 0.0
  %v743 = vand.u32 %v197, 4294901760
  %v744 = vsub.f32 %v197, %v743
  %745 = vmatpush1.msra.mxu0 %v744
  %746 = vmatprep.subr.mxu0 0.0
  %v747 = vand.u32 %v198, 4294901760
  %v748 = vsub.f32 %v198, %v747
  %749 = vmatpush1.msra.mxu0 %v748
  %750 = vmatprep.subr.mxu0 0.0
  %v751 = vand.u32 %v199, 4294901760
  %v752 = vsub.f32 %v199, %v751
  %753 = vmatpush1.msra.mxu0 %v752
  %754 = vmatprep.subr.mxu0 0.0
  %v755 = vand.u32 %v200, 4294901760
  %v756 = vsub.f32 %v200, %v755
  %757 = vmatpush1.msra.mxu0 %v756
  %758 = vmatprep.subr.mxu0 0.0
  %v759 = vand.u32 %v201, 4294901760
  %v760 = vsub.f32 %v201, %v759
  %761 = vmatpush1.msra.mxu0 %v760
  %762 = vmatprep.subr.mxu0 0.0
  %v763 = vand.u32 %v202, 4294901760
  %v764 = vsub.f32 %v202, %v763
  %765 = vmatpush1.msra.mxu0 %v764
  %766 = vmatprep.subr.mxu0 0.0
  %v767 = vand.u32 %v203, 4294901760
  %v768 = vsub.f32 %v203, %v767
  %769 = vmatpush1.msra.mxu0 %v768
  %770 = vmatprep.subr.mxu0 0.0
  %v771 = vand.u32 %v204, 4294901760
  %v772 = vsub.f32 %v204, %v771
  %773 = vmatpush1.msra.mxu0 %v772
  %774 = vmatprep.subr.mxu0 0.0
  %v775 = vand.u32 %v205, 4294901760
  %v776 = vsub.f32 %v205, %v775
  %777 = vmatpush1.msra.mxu0 %v776
  %778 = vmatprep.subr.mxu0 0.0
  %v779 = vand.u32 %v206, 4294901760
  %v780 = vsub.f32 %v206, %v779
  %781 = vmatpush1.msra.mxu0 %v780
  %782 = vmatprep.subr.mxu0 0.0
  %v783 = vand.u32 %v207, 4294901760
  %v784 = vsub.f32 %v207, %v783
  %785 = vmatpush1.msra.mxu0 %v784
  %786 = vmatprep.subr.mxu0 0.0
  %787 = vmatpush1.msra.mxu0 0.0
  %788 = vmatprep.subr.mxu0 0.0
  %789 = vmatpush1.msra.mxu0 0.0
  %790 = vmatprep.subr.mxu0 0.0
  %791 = vmatpush1.msra.mxu0 0.0
  %792 = vmatprep.subr.mxu0 0.0
  %793 = vmatpush1.msra.mxu0 0.0
  %794 = vmatprep.subr.mxu0 0.0
  %795 = vmatpush1.msra.mxu0 0.0
  %796 = vmatprep.subr.mxu0 0.0
  %797 = vmatpush1.msra.mxu0 0.0
  %798 = vmatprep.subr.mxu0 0.0
  %799 = vmatpush1.msra.mxu0 0.0
  %800 = vmatprep.subr.mxu0 0.0
  %801 = vmatpush1.msra.mxu0 0.0
  %802 = vmatprep.subr.mxu0 0.0
  %803 = vmatpush1.msra.mxu0 0.0
  %804 = vmatprep.subr.mxu0 0.0
  %805 = vmatpush1.msra.mxu0 0.0
  %806 = vmatprep.subr.mxu0 0.0
  %807 = vmatpush1.msra.mxu0 0.0
  %808 = vmatprep.subr.mxu0 0.0
  %809 = vmatpush1.msra.mxu0 0.0
  %810 = vmatprep.subr.mxu0 0.0
  %811 = vmatpush1.msra.mxu0 0.0
  %812 = vmatprep.subr.mxu0 0.0
  %813 = vmatpush1.msra.mxu0 0.0
  %814 = vmatprep.subr.mxu0 0.0
  %815 = vmatpush1.msra.mxu0 0.0
  %816 = vmatprep.subr.mxu0 0.0
  %817 = vmatpush1.msra.mxu0 0.0
  %818 = vmatprep.mubr.f32.mxu0 0.0
  %v819 = vand.u32 %v224, 4294901760
  %v820 = vsub.f32 %v224, %v819
  %821 = vmatmul.mubr.f32.gmra.mrb[0].mxu0 %v820
  %v822 = vpop.f32.mrb[0].mxu0
  %v823 = vadd.f32 %v629, %v822
  %v824 = vpop.f32.mrb[0].mxu0
  %825 = vmatprep.mubr.f32.mxu0 0.0
  %v826 = vand.u32 %v225, 4294901760
  %v827 = vsub.f32 %v225, %v826
  %828 = vmatmul.mubr.f32.gmra.mrb[0].mxu0 %v827
  %v829 = vpop.f32.mrb[0].mxu0
  %v830 = vadd.f32 %v635, %v829
  %v831 = vpop.f32.mrb[0].mxu0
  %832 = vmatprep.mubr.f32.mxu0 0.0
  %v833 = vand.u32 %v226, 4294901760
  %v834 = vsub.f32 %v226, %v833
  %835 = vmatmul.mubr.f32.gmra.mrb[0].mxu0 %v834
  %v836 = vpop.f32.mrb[0].mxu0
  %v837 = vadd.f32 %v641, %v836
  %v838 = vpop.f32.mrb[0].mxu0
  %839 = vmatprep.mubr.f32.mxu0 0.0
  %v840 = vand.u32 %v227, 4294901760
  %v841 = vsub.f32 %v227, %v840
  %842 = vmatmul.mubr.f32.gmra.mrb[0].mxu0 %v841
  %v843 = vpop.f32.mrb[0].mxu0
  %v844 = vadd.f32 %v647, %v843
  %v845 = vpop.f32.mrb[0].mxu0
  %846 = vmatprep.mubr.f32.mxu0 0.0
  %v847 = vand.u32 %v228, 4294901760
  %v848 = vsub.f32 %v228, %v847
  %849 = vmatmul.mubr.f32.gmra.mrb[0].mxu0 %v848
  %v850 = vpop.f32.mrb[0].mxu0
  %v851 = vadd.f32 %v653, %v850
  %v852 = vpop.f32.mrb[0].mxu0
  %853 = vmatprep.mubr.f32.mxu0 0.0
  %v854 = vand.u32 %v229, 4294901760
  %v855 = vsub.f32 %v229, %v854
  %856 = vmatmul.mubr.f32.gmra.mrb[0].mxu0 %v855
  %v857 = vpop.f32.mrb[0].mxu0
  %v858 = vadd.f32 %v659, %v857
  %v859 = vpop.f32.mrb[0].mxu0
  %860 = vmatprep.mubr.f32.mxu0 0.0
  %v861 = vand.u32 %v230, 4294901760
  %v862 = vsub.f32 %v230, %v861
  %863 = vmatmul.mubr.f32.gmra.mrb[0].mxu0 %v862
  %v864 = vpop.f32.mrb[0].mxu0
  %v865 = vadd.f32 %v665, %v864
  %v866 = vpop.f32.mrb[0].mxu0
  %867 = vmatprep.mubr.f32.mxu0 0.0
  %v868 = vand.u32 %v231, 4294901760
  %v869 = vsub.f32 %v231, %v868
  %870 = vmatmul.mubr.f32.gmra.mrb[0].mxu0 %v869
  %v871 = vpop.f32.mrb[0].mxu0
  %v872 = vadd.f32 %v671, %v871
  %v873 = vpop.f32.mrb[0].mxu0
  %874 = vmatprep.mubr.f32.mxu0 0.0
  %v875 = vand.u32 %v232, 4294901760
  %v876 = vsub.f32 %v232, %v875
  %877 = vmatmul.mubr.f32.gmra.mrb[0].mxu0 %v876
  %v878 = vpop.f32.mrb[0].mxu0
  %v879 = vadd.f32 %v677, %v878
  %v880 = vpop.f32.mrb[0].mxu0
  %881 = vmatprep.mubr.f32.mxu0 0.0
  %v882 = vand.u32 %v233, 4294901760
  %v883 = vsub.f32 %v233, %v882
  %884 = vmatmul.mubr.f32.gmra.mrb[0].mxu0 %v883
  %v885 = vpop.f32.mrb[0].mxu0
  %v886 = vadd.f32 %v683, %v885
  %v887 = vpop.f32.mrb[0].mxu0
  %888 = vmatprep.mubr.f32.mxu0 0.0
  %v889 = vand.u32 %v234, 4294901760
  %v890 = vsub.f32 %v234, %v889
  %891 = vmatmul.mubr.f32.gmra.mrb[0].mxu0 %v890
  %v892 = vpop.f32.mrb[0].mxu0
  %v893 = vadd.f32 %v689, %v892
  %v894 = vpop.f32.mrb[0].mxu0
  %895 = vmatprep.mubr.f32.mxu0 0.0
  %v896 = vand.u32 %v235, 4294901760
  %v897 = vsub.f32 %v235, %v896
  %898 = vmatmul.mubr.f32.gmra.mrb[0].mxu0 %v897
  %v899 = vpop.f32.mrb[0].mxu0
  %v900 = vadd.f32 %v695, %v899
  %v901 = vpop.f32.mrb[0].mxu0
  %902 = vmatprep.mubr.f32.mxu0 0.0
  %v903 = vand.u32 %v236, 4294901760
  %v904 = vsub.f32 %v236, %v903
  %905 = vmatmul.mubr.f32.gmra.mrb[0].mxu0 %v904
  %v906 = vpop.f32.mrb[0].mxu0
  %v907 = vadd.f32 %v701, %v906
  %v908 = vpop.f32.mrb[0].mxu0
  %909 = vmatprep.mubr.f32.mxu0 0.0
  %v910 = vand.u32 %v237, 4294901760
  %v911 = vsub.f32 %v237, %v910
  %912 = vmatmul.mubr.f32.gmra.mrb[0].mxu0 %v911
  %v913 = vpop.f32.mrb[0].mxu0
  %v914 = vadd.f32 %v707, %v913
  %v915 = vpop.f32.mrb[0].mxu0
  %916 = vmatprep.mubr.f32.mxu0 0.0
  %v917 = vand.u32 %v238, 4294901760
  %v918 = vsub.f32 %v238, %v917
  %919 = vmatmul.mubr.f32.gmra.mrb[0].mxu0 %v918
  %v920 = vpop.f32.mrb[0].mxu0
  %v921 = vadd.f32 %v713, %v920
  %v922 = vpop.f32.mrb[0].mxu0
  %923 = vmatprep.mubr.f32.mxu0 0.0
  %v924 = vand.u32 %v239, 4294901760
  %v925 = vsub.f32 %v239, %v924
  %926 = vmatmul.mubr.f32.gmra.mrb[0].mxu0 %v925
  %v927 = vpop.f32.mrb[0].mxu0
  %v928 = vadd.f32 %v719, %v927
  %v929 = vpop.f32.mrb[0].mxu0
  %930 = vdwg.mxu0
  %931 = vmatprep.subr.mxu0 0.0
  %v932 = vand.u32 %v192, 4294901760
  %933 = vmatpush1.msra.mxu0 %v932
  %934 = vmatprep.subr.mxu0 0.0
  %v935 = vand.u32 %v193, 4294901760
  %936 = vmatpush1.msra.mxu0 %v935
  %937 = vmatprep.subr.mxu0 0.0
  %v938 = vand.u32 %v194, 4294901760
  %939 = vmatpush1.msra.mxu0 %v938
  %940 = vmatprep.subr.mxu0 0.0
  %v941 = vand.u32 %v195, 4294901760
  %942 = vmatpush1.msra.mxu0 %v941
  %943 = vmatprep.subr.mxu0 0.0
  %v944 = vand.u32 %v196, 4294901760
  %945 = vmatpush1.msra.mxu0 %v944
  %946 = vmatprep.subr.mxu0 0.0
  %v947 = vand.u32 %v197, 4294901760
  %948 = vmatpush1.msra.mxu0 %v947
  %949 = vmatprep.subr.mxu0 0.0
  %v950 = vand.u32 %v198, 4294901760
  %951 = vmatpush1.msra.mxu0 %v950
  %952 = vmatprep.subr.mxu0 0.0
  %v953 = vand.u32 %v199, 4294901760
  %954 = vmatpush1.msra.mxu0 %v953
  %955 = vmatprep.subr.mxu0 0.0
  %v956 = vand.u32 %v200, 4294901760
  %957 = vmatpush1.msra.mxu0 %v956
  %958 = vmatprep.subr.mxu0 0.0
  %v959 = vand.u32 %v201, 4294901760
  %960 = vmatpush1.msra.mxu0 %v959
  %961 = vmatprep.subr.mxu0 0.0
  %v962 = vand.u32 %v202, 4294901760
  %963 = vmatpush1.msra.mxu0 %v962
  %964 = vmatprep.subr.mxu0 0.0
  %v965 = vand.u32 %v203, 4294901760
  %966 = vmatpush1.msra.mxu0 %v965
  %967 = vmatprep.subr.mxu0 0.0
  %v968 = vand.u32 %v204, 4294901760
  %969 = vmatpush1.msra.mxu0 %v968
  %970 = vmatprep.subr.mxu0 0.0
  %v971 = vand.u32 %v205, 4294901760
  %972 = vmatpush1.msra.mxu0 %v971
  %973 = vmatprep.subr.mxu0 0.0
  %v974 = vand.u32 %v206, 4294901760
  %975 = vmatpush1.msra.mxu0 %v974
  %976 = vmatprep.subr.mxu0 0.0
  %v977 = vand.u32 %v207, 4294901760
  %978 = vmatpush1.msra.mxu0 %v977
  %979 = vmatprep.subr.mxu0 0.0
  %980 = vmatpush1.msra.mxu0 0.0
  %981 = vmatprep.subr.mxu0 0.0
  %982 = vmatpush1.msra.mxu0 0.0
  %983 = vmatprep.subr.mxu0 0.0
  %984 = vmatpush1.msra.mxu0 0.0
  %985 = vmatprep.subr.mxu0 0.0
  %986 = vmatpush1.msra.mxu0 0.0
  %987 = vmatprep.subr.mxu0 0.0
  %988 = vmatpush1.msra.mxu0 0.0
  %989 = vmatprep.subr.mxu0 0.0
  %990 = vmatpush1.msra.mxu0 0.0
  %991 = vmatprep.subr.mxu0 0.0
  %992 = vmatpush1.msra.mxu0 0.0
  %993 = vmatprep.subr.mxu0 0.0
  %994 = vmatpush1.msra.mxu0 0.0
  %995 = vmatprep.subr.mxu0 0.0
  %996 = vmatpush1.msra.mxu0 0.0
  %997 = vmatprep.subr.mxu0 0.0
  %998 = vmatpush1.msra.mxu0 0.0
  %999 = vmatprep.subr.mxu0 0.0
  %1000 = vmatpush1.msra.mxu0 0.0
  %1001 = vmatprep.subr.mxu0 0.0
  %1002 = vmatpush1.msra.mxu0 0.0
  %1003 = vmatprep.subr.mxu0 0.0
  %1004 = vmatpush1.msra.mxu0 0.0
  %1005 = vmatprep.subr.mxu0 0.0
  %1006 = vmatpush1.msra.mxu0 0.0
  %1007 = vmatprep.subr.mxu0 0.0
  %1008 = vmatpush1.msra.mxu0 0.0
  %1009 = vmatprep.subr.mxu0 0.0
  %1010 = vmatpush1.msra.mxu0 0.0
  %1011 = vmatprep.mubr.f32.mxu0 0.0
  %v1012 = vand.u32 %v224, 4294901760
  %v1013 = vsub.f32 %v224, %v1012
  %v1014 = vand.u32 %v1013, 4294901760
  %1015 = vmatmul.mubr.f32.gmra.mrb[0].mxu0 %v1014
  %v1016 = vpop.f32.mrb[0].mxu0
  %v1017 = vadd.f32 %v823, %v1016
  %v1018 = vpop.f32.mrb[0].mxu0
  %1019 = vmatprep.mubr.f32.mxu0 0.0
  %v1020 = vand.u32 %v225, 4294901760
  %v1021 = vsub.f32 %v225, %v1020
  %v1022 = vand.u32 %v1021, 4294901760
  %1023 = vmatmul.mubr.f32.gmra.mrb[0].mxu0 %v1022
  %v1024 = vpop.f32.mrb[0].mxu0
  %v1025 = vadd.f32 %v830, %v1024
  %v1026 = vpop.f32.mrb[0].mxu0
  %1027 = vmatprep.mubr.f32.mxu0 0.0
  %v1028 = vand.u32 %v226, 4294901760
  %v1029 = vsub.f32 %v226, %v1028
  %v1030 = vand.u32 %v1029, 4294901760
  %1031 = vmatmul.mubr.f32.gmra.mrb[0].mxu0 %v1030
  %v1032 = vpop.f32.mrb[0].mxu0
  %v1033 = vadd.f32 %v837, %v1032
  %v1034 = vpop.f32.mrb[0].mxu0
  %1035 = vmatprep.mubr.f32.mxu0 0.0
  %v1036 = vand.u32 %v227, 4294901760
  %v1037 = vsub.f32 %v227, %v1036
  %v1038 = vand.u32 %v1037, 4294901760
  %1039 = vmatmul.mubr.f32.gmra.mrb[0].mxu0 %v1038
  %v1040 = vpop.f32.mrb[0].mxu0
  %v1041 = vadd.f32 %v844, %v1040
  %v1042 = vpop.f32.mrb[0].mxu0
  %1043 = vmatprep.mubr.f32.mxu0 0.0
  %v1044 = vand.u32 %v228, 4294901760
  %v1045 = vsub.f32 %v228, %v1044
  %v1046 = vand.u32 %v1045, 4294901760
  %1047 = vmatmul.mubr.f32.gmra.mrb[0].mxu0 %v1046
  %v1048 = vpop.f32.mrb[0].mxu0
  %v1049 = vadd.f32 %v851, %v1048
  %v1050 = vpop.f32.mrb[0].mxu0
  %1051 = vmatprep.mubr.f32.mxu0 0.0
  %v1052 = vand.u32 %v229, 4294901760
  %v1053 = vsub.f32 %v229, %v1052
  %v1054 = vand.u32 %v1053, 4294901760
  %1055 = vmatmul.mubr.f32.gmra.mrb[0].mxu0 %v1054
  %v1056 = vpop.f32.mrb[0].mxu0
  %v1057 = vadd.f32 %v858, %v1056
  %v1058 = vpop.f32.mrb[0].mxu0
  %1059 = vmatprep.mubr.f32.mxu0 0.0
  %v1060 = vand.u32 %v230, 4294901760
  %v1061 = vsub.f32 %v230, %v1060
  %v1062 = vand.u32 %v1061, 4294901760
  %1063 = vmatmul.mubr.f32.gmra.mrb[0].mxu0 %v1062
  %v1064 = vpop.f32.mrb[0].mxu0
  %v1065 = vadd.f32 %v865, %v1064
  %v1066 = vpop.f32.mrb[0].mxu0
  %1067 = vmatprep.mubr.f32.mxu0 0.0
  %v1068 = vand.u32 %v231, 4294901760
  %v1069 = vsub.f32 %v231, %v1068
  %v1070 = vand.u32 %v1069, 4294901760
  %1071 = vmatmul.mubr.f32.gmra.mrb[0].mxu0 %v1070
  %v1072 = vpop.f32.mrb[0].mxu0
  %v1073 = vadd.f32 %v872, %v1072
  %v1074 = vpop.f32.mrb[0].mxu0
  %1075 = vmatprep.mubr.f32.mxu0 0.0
  %v1076 = vand.u32 %v232, 4294901760
  %v1077 = vsub.f32 %v232, %v1076
  %v1078 = vand.u32 %v1077, 4294901760
  %1079 = vmatmul.mubr.f32.gmra.mrb[0].mxu0 %v1078
  %v1080 = vpop.f32.mrb[0].mxu0
  %v1081 = vadd.f32 %v879, %v1080
  %v1082 = vpop.f32.mrb[0].mxu0
  %1083 = vmatprep.mubr.f32.mxu0 0.0
  %v1084 = vand.u32 %v233, 4294901760
  %v1085 = vsub.f32 %v233, %v1084
  %v1086 = vand.u32 %v1085, 4294901760
  %1087 = vmatmul.mubr.f32.gmra.mrb[0].mxu0 %v1086
  %v1088 = vpop.f32.mrb[0].mxu0
  %v1089 = vadd.f32 %v886, %v1088
  %v1090 = vpop.f32.mrb[0].mxu0
  %1091 = vmatprep.mubr.f32.mxu0 0.0
  %v1092 = vand.u32 %v234, 4294901760
  %v1093 = vsub.f32 %v234, %v1092
  %v1094 = vand.u32 %v1093, 4294901760
  %1095 = vmatmul.mubr.f32.gmra.mrb[0].mxu0 %v1094
  %v1096 = vpop.f32.mrb[0].mxu0
  %v1097 = vadd.f32 %v893, %v1096
  %v1098 = vpop.f32.mrb[0].mxu0
  %1099 = vmatprep.mubr.f32.mxu0 0.0
  %v1100 = vand.u32 %v235, 4294901760
  %v1101 = vsub.f32 %v235, %v1100
  %v1102 = vand.u32 %v1101, 4294901760
  %1103 = vmatmul.mubr.f32.gmra.mrb[0].mxu0 %v1102
  %v1104 = vpop.f32.mrb[0].mxu0
  %v1105 = vadd.f32 %v900, %v1104
  %v1106 = vpop.f32.mrb[0].mxu0
  %1107 = vmatprep.mubr.f32.mxu0 0.0
  %v1108 = vand.u32 %v236, 4294901760
  %v1109 = vsub.f32 %v236, %v1108
  %v1110 = vand.u32 %v1109, 4294901760
  %1111 = vmatmul.mubr.f32.gmra.mrb[0].mxu0 %v1110
  %v1112 = vpop.f32.mrb[0].mxu0
  %v1113 = vadd.f32 %v907, %v1112
  %v1114 = vpop.f32.mrb[0].mxu0
  %1115 = vmatprep.mubr.f32.mxu0 0.0
  %v1116 = vand.u32 %v237, 4294901760
  %v1117 = vsub.f32 %v237, %v1116
  %v1118 = vand.u32 %v1117, 4294901760
  %1119 = vmatmul.mubr.f32.gmra.mrb[0].mxu0 %v1118
  %v1120 = vpop.f32.mrb[0].mxu0
  %v1121 = vadd.f32 %v914, %v1120
  %v1122 = vpop.f32.mrb[0].mxu0
  %1123 = vmatprep.mubr.f32.mxu0 0.0
  %v1124 = vand.u32 %v238, 4294901760
  %v1125 = vsub.f32 %v238, %v1124
  %v1126 = vand.u32 %v1125, 4294901760
  %1127 = vmatmul.mubr.f32.gmra.mrb[0].mxu0 %v1126
  %v1128 = vpop.f32.mrb[0].mxu0
  %v1129 = vadd.f32 %v921, %v1128
  %v1130 = vpop.f32.mrb[0].mxu0
  %1131 = vmatprep.mubr.f32.mxu0 0.0
  %v1132 = vand.u32 %v239, 4294901760
  %v1133 = vsub.f32 %v239, %v1132
  %v1134 = vand.u32 %v1133, 4294901760
  %1135 = vmatmul.mubr.f32.gmra.mrb[0].mxu0 %v1134
  %v1136 = vpop.f32.mrb[0].mxu0
  %v1137 = vadd.f32 %v928, %v1136
  %v1138 = vpop.f32.mrb[0].mxu0
  %1139 = vdwg.mxu0
  %1140 = vmatprep.subr.mxu0 0.0
  %v1141 = vand.u32 %v192, 4294901760
  %v1142 = vsub.f32 %v192, %v1141
  %v1143 = vand.u32 %v1142, 4294901760
  %1144 = vmatpush1.msra.mxu0 %v1143
  %1145 = vmatprep.subr.mxu0 0.0
  %v1146 = vand.u32 %v193, 4294901760
  %v1147 = vsub.f32 %v193, %v1146
  %v1148 = vand.u32 %v1147, 4294901760
  %1149 = vmatpush1.msra.mxu0 %v1148
  %1150 = vmatprep.subr.mxu0 0.0
  %v1151 = vand.u32 %v194, 4294901760
  %v1152 = vsub.f32 %v194, %v1151
  %v1153 = vand.u32 %v1152, 4294901760
  %1154 = vmatpush1.msra.mxu0 %v1153
  %1155 = vmatprep.subr.mxu0 0.0
  %v1156 = vand.u32 %v195, 4294901760
  %v1157 = vsub.f32 %v195, %v1156
  %v1158 = vand.u32 %v1157, 4294901760
  %1159 = vmatpush1.msra.mxu0 %v1158
  %1160 = vmatprep.subr.mxu0 0.0
  %v1161 = vand.u32 %v196, 4294901760
  %v1162 = vsub.f32 %v196, %v1161
  %v1163 = vand.u32 %v1162, 4294901760
  %1164 = vmatpush1.msra.mxu0 %v1163
  %1165 = vmatprep.subr.mxu0 0.0
  %v1166 = vand.u32 %v197, 4294901760
  %v1167 = vsub.f32 %v197, %v1166
  %v1168 = vand.u32 %v1167, 4294901760
  %1169 = vmatpush1.msra.mxu0 %v1168
  %1170 = vmatprep.subr.mxu0 0.0
  %v1171 = vand.u32 %v198, 4294901760
  %v1172 = vsub.f32 %v198, %v1171
  %v1173 = vand.u32 %v1172, 4294901760
  %1174 = vmatpush1.msra.mxu0 %v1173
  %1175 = vmatprep.subr.mxu0 0.0
  %v1176 = vand.u32 %v199, 4294901760
  %v1177 = vsub.f32 %v199, %v1176
  %v1178 = vand.u32 %v1177, 4294901760
  %1179 = vmatpush1.msra.mxu0 %v1178
  %1180 = vmatprep.subr.mxu0 0.0
  %v1181 = vand.u32 %v200, 4294901760
  %v1182 = vsub.f32 %v200, %v1181
  %v1183 = vand.u32 %v1182, 4294901760
  %1184 = vmatpush1.msra.mxu0 %v1183
  %1185 = vmatprep.subr.mxu0 0.0
  %v1186 = vand.u32 %v201, 4294901760
  %v1187 = vsub.f32 %v201, %v1186
  %v1188 = vand.u32 %v1187, 4294901760
  %1189 = vmatpush1.msra.mxu0 %v1188
  %1190 = vmatprep.subr.mxu0 0.0
  %v1191 = vand.u32 %v202, 4294901760
  %v1192 = vsub.f32 %v202, %v1191
  %v1193 = vand.u32 %v1192, 4294901760
  %1194 = vmatpush1.msra.mxu0 %v1193
  %1195 = vmatprep.subr.mxu0 0.0
  %v1196 = vand.u32 %v203, 4294901760
  %v1197 = vsub.f32 %v203, %v1196
  %v1198 = vand.u32 %v1197, 4294901760
  %1199 = vmatpush1.msra.mxu0 %v1198
  %1200 = vmatprep.subr.mxu0 0.0
  %v1201 = vand.u32 %v204, 4294901760
  %v1202 = vsub.f32 %v204, %v1201
  %v1203 = vand.u32 %v1202, 4294901760
  %1204 = vmatpush1.msra.mxu0 %v1203
  %1205 = vmatprep.subr.mxu0 0.0
  %v1206 = vand.u32 %v205, 4294901760
  %v1207 = vsub.f32 %v205, %v1206
  %v1208 = vand.u32 %v1207, 4294901760
  %1209 = vmatpush1.msra.mxu0 %v1208
  %1210 = vmatprep.subr.mxu0 0.0
  %v1211 = vand.u32 %v206, 4294901760
  %v1212 = vsub.f32 %v206, %v1211
  %v1213 = vand.u32 %v1212, 4294901760
  %1214 = vmatpush1.msra.mxu0 %v1213
  %1215 = vmatprep.subr.mxu0 0.0
  %v1216 = vand.u32 %v207, 4294901760
  %v1217 = vsub.f32 %v207, %v1216
  %v1218 = vand.u32 %v1217, 4294901760
  %1219 = vmatpush1.msra.mxu0 %v1218
  %1220 = vmatprep.subr.mxu0 0.0
  %1221 = vmatpush1.msra.mxu0 0.0
  %1222 = vmatprep.subr.mxu0 0.0
  %1223 = vmatpush1.msra.mxu0 0.0
  %1224 = vmatprep.subr.mxu0 0.0
  %1225 = vmatpush1.msra.mxu0 0.0
  %1226 = vmatprep.subr.mxu0 0.0
  %1227 = vmatpush1.msra.mxu0 0.0
  %1228 = vmatprep.subr.mxu0 0.0
  %1229 = vmatpush1.msra.mxu0 0.0
  %1230 = vmatprep.subr.mxu0 0.0
  %1231 = vmatpush1.msra.mxu0 0.0
  %1232 = vmatprep.subr.mxu0 0.0
  %1233 = vmatpush1.msra.mxu0 0.0
  %1234 = vmatprep.subr.mxu0 0.0
  %1235 = vmatpush1.msra.mxu0 0.0
  %1236 = vmatprep.subr.mxu0 0.0
  %1237 = vmatpush1.msra.mxu0 0.0
  %1238 = vmatprep.subr.mxu0 0.0
  %1239 = vmatpush1.msra.mxu0 0.0
  %1240 = vmatprep.subr.mxu0 0.0
  %1241 = vmatpush1.msra.mxu0 0.0
  %1242 = vmatprep.subr.mxu0 0.0
  %1243 = vmatpush1.msra.mxu0 0.0
  %1244 = vmatprep.subr.mxu0 0.0
  %1245 = vmatpush1.msra.mxu0 0.0
  %1246 = vmatprep.subr.mxu0 0.0
  %1247 = vmatpush1.msra.mxu0 0.0
  %1248 = vmatprep.subr.mxu0 0.0
  %1249 = vmatpush1.msra.mxu0 0.0
  %1250 = vmatprep.subr.mxu0 0.0
  %1251 = vmatpush1.msra.mxu0 0.0
  %1252 = vmatprep.mubr.f32.mxu0 0.0
  %v1253 = vand.u32 %v224, 4294901760
  %1254 = vmatmul.mubr.f32.gmra.mrb[0].mxu0 %v1253
  %v1255 = vpop.f32.mrb[0].mxu0
  %v1256 = vadd.f32 %v1017, %v1255
  %v1257 = vpop.f32.mrb[0].mxu0
  %1258 = vmatprep.mubr.f32.mxu0 0.0
  %v1259 = vand.u32 %v225, 4294901760
  %1260 = vmatmul.mubr.f32.gmra.mrb[0].mxu0 %v1259
  %v1261 = vpop.f32.mrb[0].mxu0
  %v1262 = vadd.f32 %v1025, %v1261
  %v1263 = vpop.f32.mrb[0].mxu0
  %1264 = vmatprep.mubr.f32.mxu0 0.0
  %v1265 = vand.u32 %v226, 4294901760
  %1266 = vmatmul.mubr.f32.gmra.mrb[0].mxu0 %v1265
  %v1267 = vpop.f32.mrb[0].mxu0
  %v1268 = vadd.f32 %v1033, %v1267
  %v1269 = vpop.f32.mrb[0].mxu0
  %1270 = vmatprep.mubr.f32.mxu0 0.0
  %v1271 = vand.u32 %v227, 4294901760
  %1272 = vmatmul.mubr.f32.gmra.mrb[0].mxu0 %v1271
  %v1273 = vpop.f32.mrb[0].mxu0
  %v1274 = vadd.f32 %v1041, %v1273
  %v1275 = vpop.f32.mrb[0].mxu0
  %1276 = vmatprep.mubr.f32.mxu0 0.0
  %v1277 = vand.u32 %v228, 4294901760
  %1278 = vmatmul.mubr.f32.gmra.mrb[0].mxu0 %v1277
  %v1279 = vpop.f32.mrb[0].mxu0
  %v1280 = vadd.f32 %v1049, %v1279
  %v1281 = vpop.f32.mrb[0].mxu0
  %1282 = vmatprep.mubr.f32.mxu0 0.0
  %v1283 = vand.u32 %v229, 4294901760
  %1284 = vmatmul.mubr.f32.gmra.mrb[0].mxu0 %v1283
  %v1285 = vpop.f32.mrb[0].mxu0
  %v1286 = vadd.f32 %v1057, %v1285
  %v1287 = vpop.f32.mrb[0].mxu0
  %1288 = vmatprep.mubr.f32.mxu0 0.0
  %v1289 = vand.u32 %v230, 4294901760
  %1290 = vmatmul.mubr.f32.gmra.mrb[0].mxu0 %v1289
  %v1291 = vpop.f32.mrb[0].mxu0
  %v1292 = vadd.f32 %v1065, %v1291
  %v1293 = vpop.f32.mrb[0].mxu0
  %1294 = vmatprep.mubr.f32.mxu0 0.0
  %v1295 = vand.u32 %v231, 4294901760
  %1296 = vmatmul.mubr.f32.gmra.mrb[0].mxu0 %v1295
  %v1297 = vpop.f32.mrb[0].mxu0
  %v1298 = vadd.f32 %v1073, %v1297
  %v1299 = vpop.f32.mrb[0].mxu0
  %1300 = vmatprep.mubr.f32.mxu0 0.0
  %v1301 = vand.u32 %v232, 4294901760
  %1302 = vmatmul.mubr.f32.gmra.mrb[0].mxu0 %v1301
  %v1303 = vpop.f32.mrb[0].mxu0
  %v1304 = vadd.f32 %v1081, %v1303
  %v1305 = vpop.f32.mrb[0].mxu0
  %1306 = vmatprep.mubr.f32.mxu0 0.0
  %v1307 = vand.u32 %v233, 4294901760
  %1308 = vmatmul.mubr.f32.gmra.mrb[0].mxu0 %v1307
  %v1309 = vpop.f32.mrb[0].mxu0
  %v1310 = vadd.f32 %v1089, %v1309
  %v1311 = vpop.f32.mrb[0].mxu0
  %1312 = vmatprep.mubr.f32.mxu0 0.0
  %v1313 = vand.u32 %v234, 4294901760
  %1314 = vmatmul.mubr.f32.gmra.mrb[0].mxu0 %v1313
  %v1315 = vpop.f32.mrb[0].mxu0
  %v1316 = vadd.f32 %v1097, %v1315
  %v1317 = vpop.f32.mrb[0].mxu0
  %1318 = vmatprep.mubr.f32.mxu0 0.0
  %v1319 = vand.u32 %v235, 4294901760
  %1320 = vmatmul.mubr.f32.gmra.mrb[0].mxu0 %v1319
  %v1321 = vpop.f32.mrb[0].mxu0
  %v1322 = vadd.f32 %v1105, %v1321
  %v1323 = vpop.f32.mrb[0].mxu0
  %1324 = vmatprep.mubr.f32.mxu0 0.0
  %v1325 = vand.u32 %v236, 4294901760
  %1326 = vmatmul.mubr.f32.gmra.mrb[0].mxu0 %v1325
  %v1327 = vpop.f32.mrb[0].mxu0
  %v1328 = vadd.f32 %v1113, %v1327
  %v1329 = vpop.f32.mrb[0].mxu0
  %1330 = vmatprep.mubr.f32.mxu0 0.0
  %v1331 = vand.u32 %v237, 4294901760
  %1332 = vmatmul.mubr.f32.gmra.mrb[0].mxu0 %v1331
  %v1333 = vpop.f32.mrb[0].mxu0
  %v1334 = vadd.f32 %v1121, %v1333
  %v1335 = vpop.f32.mrb[0].mxu0
  %1336 = vmatprep.mubr.f32.mxu0 0.0
  %v1337 = vand.u32 %v238, 4294901760
  %1338 = vmatmul.mubr.f32.gmra.mrb[0].mxu0 %v1337
  %v1339 = vpop.f32.mrb[0].mxu0
  %v1340 = vadd.f32 %v1129, %v1339
  %v1341 = vpop.f32.mrb[0].mxu0
  %1342 = vmatprep.mubr.f32.mxu0 0.0
  %v1343 = vand.u32 %v239, 4294901760
  %1344 = vmatmul.mubr.f32.gmra.mrb[0].mxu0 %v1343
  %v1345 = vpop.f32.mrb[0].mxu0
  %v1346 = vadd.f32 %v1137, %v1345
  %v1347 = vpop.f32.mrb[0].mxu0
  %1348 = vdwg.mxu0
  %1349 = vmatprep.subr.mxu0 0.0
  %v1350 = vand.u32 %v192, 4294901760
  %1351 = vmatpush1.msra.mxu0 %v1350
  %1352 = vmatprep.subr.mxu0 0.0
  %v1353 = vand.u32 %v193, 4294901760
  %1354 = vmatpush1.msra.mxu0 %v1353
  %1355 = vmatprep.subr.mxu0 0.0
  %v1356 = vand.u32 %v194, 4294901760
  %1357 = vmatpush1.msra.mxu0 %v1356
  %1358 = vmatprep.subr.mxu0 0.0
  %v1359 = vand.u32 %v195, 4294901760
  %1360 = vmatpush1.msra.mxu0 %v1359
  %1361 = vmatprep.subr.mxu0 0.0
  %v1362 = vand.u32 %v196, 4294901760
  %1363 = vmatpush1.msra.mxu0 %v1362
  %1364 = vmatprep.subr.mxu0 0.0
  %v1365 = vand.u32 %v197, 4294901760
  %1366 = vmatpush1.msra.mxu0 %v1365
  %1367 = vmatprep.subr.mxu0 0.0
  %v1368 = vand.u32 %v198, 4294901760
  %1369 = vmatpush1.msra.mxu0 %v1368
  %1370 = vmatprep.subr.mxu0 0.0
  %v1371 = vand.u32 %v199, 4294901760
  %1372 = vmatpush1.msra.mxu0 %v1371
  %1373 = vmatprep.subr.mxu0 0.0
  %v1374 = vand.u32 %v200, 4294901760
  %1375 = vmatpush1.msra.mxu0 %v1374
  %1376 = vmatprep.subr.mxu0 0.0
  %v1377 = vand.u32 %v201, 4294901760
  %1378 = vmatpush1.msra.mxu0 %v1377
  %1379 = vmatprep.subr.mxu0 0.0
  %v1380 = vand.u32 %v202, 4294901760
  %1381 = vmatpush1.msra.mxu0 %v1380
  %1382 = vmatprep.subr.mxu0 0.0
  %v1383 = vand.u32 %v203, 4294901760
  %1384 = vmatpush1.msra.mxu0 %v1383
  %1385 = vmatprep.subr.mxu0 0.0
  %v1386 = vand.u32 %v204, 4294901760
  %1387 = vmatpush1.msra.mxu0 %v1386
  %1388 = vmatprep.subr.mxu0 0.0
  %v1389 = vand.u32 %v205, 4294901760
  %1390 = vmatpush1.msra.mxu0 %v1389
  %1391 = vmatprep.subr.mxu0 0.0
  %v1392 = vand.u32 %v206, 4294901760
  %1393 = vmatpush1.msra.mxu0 %v1392
  %1394 = vmatprep.subr.mxu0 0.0
  %v1395 = vand.u32 %v207, 4294901760
  %1396 = vmatpush1.msra.mxu0 %v1395
  %1397 = vmatprep.subr.mxu0 0.0
  %1398 = vmatpush1.msra.mxu0 0.0
  %1399 = vmatprep.subr.mxu0 0.0
  %1400 = vmatpush1.msra.mxu0 0.0
  %1401 = vmatprep.subr.mxu0 0.0
  %1402 = vmatpush1.msra.mxu0 0.0
  %1403 = vmatprep.subr.mxu0 0.0
  %1404 = vmatpush1.msra.mxu0 0.0
  %1405 = vmatprep.subr.mxu0 0.0
  %1406 = vmatpush1.msra.mxu0 0.0
  %1407 = vmatprep.subr.mxu0 0.0
  %1408 = vmatpush1.msra.mxu0 0.0
  %1409 = vmatprep.subr.mxu0 0.0
  %1410 = vmatpush1.msra.mxu0 0.0
  %1411 = vmatprep.subr.mxu0 0.0
  %1412 = vmatpush1.msra.mxu0 0.0
  %1413 = vmatprep.subr.mxu0 0.0
  %1414 = vmatpush1.msra.mxu0 0.0
  %1415 = vmatprep.subr.mxu0 0.0
  %1416 = vmatpush1.msra.mxu0 0.0
  %1417 = vmatprep.subr.mxu0 0.0
  %1418 = vmatpush1.msra.mxu0 0.0
  %1419 = vmatprep.subr.mxu0 0.0
  %1420 = vmatpush1.msra.mxu0 0.0
  %1421 = vmatprep.subr.mxu0 0.0
  %1422 = vmatpush1.msra.mxu0 0.0
  %1423 = vmatprep.subr.mxu0 0.0
  %1424 = vmatpush1.msra.mxu0 0.0
  %1425 = vmatprep.subr.mxu0 0.0
  %1426 = vmatpush1.msra.mxu0 0.0
  %1427 = vmatprep.subr.mxu0 0.0
  %1428 = vmatpush1.msra.mxu0 0.0
  %1429 = vmatprep.mubr.f32.mxu0 0.0
  %v1430 = vand.u32 %v224, 4294901760
  %1431 = vmatmul.mubr.f32.gmra.mrb[0].mxu0 %v1430
  %v1432 = vpop.f32.mrb[0].mxu0
  %v1433 = vadd.f32 %v1256, %v1432
  %v1434 = vpop.f32.mrb[0].mxu0
  %1435 = vmatprep.mubr.f32.mxu0 0.0
  %v1436 = vand.u32 %v225, 4294901760
  %1437 = vmatmul.mubr.f32.gmra.mrb[0].mxu0 %v1436
  %v1438 = vpop.f32.mrb[0].mxu0
  %v1439 = vadd.f32 %v1262, %v1438
  %v1440 = vpop.f32.mrb[0].mxu0
  %1441 = vmatprep.mubr.f32.mxu0 0.0
  %v1442 = vand.u32 %v226, 4294901760
  %1443 = vmatmul.mubr.f32.gmra.mrb[0].mxu0 %v1442
  %v1444 = vpop.f32.mrb[0].mxu0
  %v1445 = vadd.f32 %v1268, %v1444
  %v1446 = vpop.f32.mrb[0].mxu0
  %1447 = vmatprep.mubr.f32.mxu0 0.0
  %v1448 = vand.u32 %v227, 4294901760
  %1449 = vmatmul.mubr.f32.gmra.mrb[0].mxu0 %v1448
  %v1450 = vpop.f32.mrb[0].mxu0
  %v1451 = vadd.f32 %v1274, %v1450
  %v1452 = vpop.f32.mrb[0].mxu0
  %1453 = vmatprep.mubr.f32.mxu0 0.0
  %v1454 = vand.u32 %v228, 4294901760
  %1455 = vmatmul.mubr.f32.gmra.mrb[0].mxu0 %v1454
  %v1456 = vpop.f32.mrb[0].mxu0
  %v1457 = vadd.f32 %v1280, %v1456
  %v1458 = vpop.f32.mrb[0].mxu0
  %1459 = vmatprep.mubr.f32.mxu0 0.0
  %v1460 = vand.u32 %v229, 4294901760
  %1461 = vmatmul.mubr.f32.gmra.mrb[0].mxu0 %v1460
  %v1462 = vpop.f32.mrb[0].mxu0
  %v1463 = vadd.f32 %v1286, %v1462
  %v1464 = vpop.f32.mrb[0].mxu0
  %1465 = vmatprep.mubr.f32.mxu0 0.0
  %v1466 = vand.u32 %v230, 4294901760
  %1467 = vmatmul.mubr.f32.gmra.mrb[0].mxu0 %v1466
  %v1468 = vpop.f32.mrb[0].mxu0
  %v1469 = vadd.f32 %v1292, %v1468
  %v1470 = vpop.f32.mrb[0].mxu0
  %1471 = vmatprep.mubr.f32.mxu0 0.0
  %v1472 = vand.u32 %v231, 4294901760
  %1473 = vmatmul.mubr.f32.gmra.mrb[0].mxu0 %v1472
  %v1474 = vpop.f32.mrb[0].mxu0
  %v1475 = vadd.f32 %v1298, %v1474
  %v1476 = vpop.f32.mrb[0].mxu0
  %1477 = vmatprep.mubr.f32.mxu0 0.0
  %v1478 = vand.u32 %v232, 4294901760
  %1479 = vmatmul.mubr.f32.gmra.mrb[0].mxu0 %v1478
  %v1480 = vpop.f32.mrb[0].mxu0
  %v1481 = vadd.f32 %v1304, %v1480
  %v1482 = vpop.f32.mrb[0].mxu0
  %1483 = vmatprep.mubr.f32.mxu0 0.0
  %v1484 = vand.u32 %v233, 4294901760
  %1485 = vmatmul.mubr.f32.gmra.mrb[0].mxu0 %v1484
  %v1486 = vpop.f32.mrb[0].mxu0
  %v1487 = vadd.f32 %v1310, %v1486
  %v1488 = vpop.f32.mrb[0].mxu0
  %1489 = vmatprep.mubr.f32.mxu0 0.0
  %v1490 = vand.u32 %v234, 4294901760
  %1491 = vmatmul.mubr.f32.gmra.mrb[0].mxu0 %v1490
  %v1492 = vpop.f32.mrb[0].mxu0
  %v1493 = vadd.f32 %v1316, %v1492
  %v1494 = vpop.f32.mrb[0].mxu0
  %1495 = vmatprep.mubr.f32.mxu0 0.0
  %v1496 = vand.u32 %v235, 4294901760
  %1497 = vmatmul.mubr.f32.gmra.mrb[0].mxu0 %v1496
  %v1498 = vpop.f32.mrb[0].mxu0
  %v1499 = vadd.f32 %v1322, %v1498
  %v1500 = vpop.f32.mrb[0].mxu0
  %1501 = vmatprep.mubr.f32.mxu0 0.0
  %v1502 = vand.u32 %v236, 4294901760
  %1503 = vmatmul.mubr.f32.gmra.mrb[0].mxu0 %v1502
  %v1504 = vpop.f32.mrb[0].mxu0
  %v1505 = vadd.f32 %v1328, %v1504
  %v1506 = vpop.f32.mrb[0].mxu0
  %1507 = vmatprep.mubr.f32.mxu0 0.0
  %v1508 = vand.u32 %v237, 4294901760
  %1509 = vmatmul.mubr.f32.gmra.mrb[0].mxu0 %v1508
  %v1510 = vpop.f32.mrb[0].mxu0
  %v1511 = vadd.f32 %v1334, %v1510
  %v1512 = vpop.f32.mrb[0].mxu0
  %1513 = vmatprep.mubr.f32.mxu0 0.0
  %v1514 = vand.u32 %v238, 4294901760
  %1515 = vmatmul.mubr.f32.gmra.mrb[0].mxu0 %v1514
  %v1516 = vpop.f32.mrb[0].mxu0
  %v1517 = vadd.f32 %v1340, %v1516
  %v1518 = vpop.f32.mrb[0].mxu0
  %1519 = vmatprep.mubr.f32.mxu0 0.0
  %v1520 = vand.u32 %v239, 4294901760
  %1521 = vmatmul.mubr.f32.gmra.mrb[0].mxu0 %v1520
  %v1522 = vpop.f32.mrb[0].mxu0
  %v1523 = vadd.f32 %v1346, %v1522
  %v1524 = vpop.f32.mrb[0].mxu0
  %1525 = vdwg.mxu0
  %vm1526 = vcmask 261120
  %1527 = vst.msk [vmem:[%s2] sm:$0xff] %vm1526, %v1433
  %1528 = vst.msk [vmem:[%s2 + $0x8] sm:$0xff] %vm1526, %v1439
  %1529 = vst.msk [vmem:[%s2 + $0x10] sm:$0xff] %vm1526, %v1445
  %1530 = vst.msk [vmem:[%s2 + $0x18] sm:$0xff] %vm1526, %v1451
  %1531 = vst.msk [vmem:[%s2 + $0x20] sm:$0xff] %vm1526, %v1457
  %1532 = vst.msk [vmem:[%s2 + $0x28] sm:$0xff] %vm1526, %v1463
  %1533 = vst.msk [vmem:[%s2 + $0x30] sm:$0xff] %vm1526, %v1469
  %1534 = vst.msk [vmem:[%s2 + $0x38] sm:$0xff] %vm1526, %v1475
  %1535 = vst.msk [vmem:[%s2 + $0x40] sm:$0xff] %vm1526, %v1481
  %1536 = vst.msk [vmem:[%s2 + $0x48] sm:$0xff] %vm1526, %v1487
  %1537 = vst.msk [vmem:[%s2 + $0x50] sm:$0xff] %vm1526, %v1493
  %1538 = vst.msk [vmem:[%s2 + $0x58] sm:$0xff] %vm1526, %v1499
  %1539 = vst.msk [vmem:[%s2 + $0x60] sm:$0xff] %vm1526, %v1505
  %1540 = vst.msk [vmem:[%s2 + $0x68] sm:$0xff] %vm1526, %v1511
  %1541 = vst.msk [vmem:[%s2 + $0x70] sm:$0xff] %vm1526, %v1517
  %1542 = vst.msk [vmem:[%s2 + $0x78] sm:$0xff] %vm1526, %v1523
  // Predicated region
  $region10: #{temporal_embedding.1} parent=0 // pred_check
    _
  $region11: #{temporal_embedding.1} parent=0 // pred_check_branch
    %1544 = sbr.rel (0) target = $region13
  $region12: #{temporal_embedding.1} parent=0 // pred_region
    _
  $region13: #{temporal_embedding.1} parent=0 // pred_fallthru
    _
  // Predicated region
  $region14: #{temporal_embedding.1} parent=0 // pred_check
    _
  $region15: #{temporal_embedding.1} parent=0 // pred_check_branch
    %1546 = sbr.rel (0) target = $region17
  $region16: #{temporal_embedding.1} parent=0 // pred_region
    _
  $region17: #{temporal_embedding.1} parent=0 // pred_fallthru
    _

</llo_original>
